<compile_context>
chip_gen: v5e
topology: v5e:2x2
jax: 0.10.0
libtpu: 0.0.40
codegen_flags: <defaults>
</compile_context>

<pallas_src>
import jax
import jax.numpy as jnp
from jax.experimental import pallas as pl
from jax.experimental.pallas import tpu as pltpu


# ---------------------------------------------------------------------------
# Pallas kernels
# ---------------------------------------------------------------------------
def conv_pool_bn_kernel(w_ref, b_ref, scale_ref, shift_ref, cols_ref, o_ref):
    """Fused conv-as-GEMM + 2x2 maxpool + bias + ReLU + eval BatchNorm.

    w:            [4*Cp, 4*K]   block-diagonal conv weight (one block/corner)
    b/scale/shift:[Cp, 1]       per-channel bias / folded BN affine
    cols:         [4*K, TN]     4 pooling-corner im2col patches stacked along K
    o:            [Cp, TN]      channel-major pooled+BN output tile (lane dense)
    """
    cp = o_ref.shape[0]
    acc = jnp.dot(w_ref[...], cols_ref[...],
                  preferred_element_type=jnp.float32)            # [4*Cp, TN]
    m = jnp.maximum(jnp.maximum(acc[0 * cp:1 * cp], acc[1 * cp:2 * cp]),
                    jnp.maximum(acc[2 * cp:3 * cp], acc[3 * cp:4 * cp]))
    # max(relu(x + b)) == relu(max(x) + b)  (shared per-channel bias, relu monotone)
    y = jnp.maximum(m + b_ref[...], 0.0)
    o_ref[...] = (y * scale_ref[...] + shift_ref[...]).astype(o_ref.dtype)


def fc_stack_kernel(x_ref, w1_ref, b1_ref, w2_ref, b2_ref, w3_ref, b3_ref, o_ref):
    """Fused fc1(+ReLU) -> fc2(+ReLU, Dropout eval identity) -> fc3.
    All widths pre-padded to 128 lanes; biases f32, weights bf16."""
    h = jnp.dot(x_ref[...], w1_ref[...], preferred_element_type=jnp.float32) + b1_ref[...]
    h = jnp.maximum(h, 0.0).astype(w2_ref.dtype)
    h = jnp.dot(h, w2_ref[...], preferred_element_type=jnp.float32) + b2_ref[...]
    h = jnp.maximum(h, 0.0).astype(w3_ref.dtype)
    # TODO(synk): Dropout(p=0.3) eval-mode identity (no RNG mask).
    o_ref[...] = (jnp.dot(h, w3_ref[...], preferred_element_type=jnp.float32)
                  + b3_ref[...]).astype(o_ref.dtype)


# ---------------------------------------------------------------------------
# Pallas wrappers
# ---------------------------------------------------------------------------
def _full(shape):
    return pl.BlockSpec(shape, lambda i: (0,) * len(shape))


def pallas_conv_pool_bn(cols, w_bd, b, scale, shift):
    """cols: [4K, Npad] bf16; w_bd: [4Cp, 4K] bf16; b/scale/shift: [Cp,1] f32."""
    four_c, four_k = w_bd.shape
    cp = four_c // 4
    kr, npad = cols.shape
    tile = 128
    for t in (1024, 512, 256, 128):           # largest 128-multiple dividing Npad
        if npad % t == 0:
            tile = t
            break
    n_tiles = npad // tile
    return pl.pallas_call(
        conv_pool_bn_kernel,
        out_shape=jax.ShapeDtypeStruct((cp, npad), jnp.float32),
        grid=(n_tiles,),
        in_specs=[_full((four_c, four_k)), _full((cp, 1)), _full((cp, 1)), _full((cp, 1)),
                  pl.BlockSpec((kr, tile), lambda i: (0, i))],
        out_specs=pl.BlockSpec((cp, tile), lambda i: (0, i)),
        compiler_params=pltpu.CompilerParams(
            dimension_semantics=("parallel",),
            vmem_limit_bytes=32 * 1024 * 1024),
    )(w_bd, b, scale, shift, cols)


def pallas_fc_stack(x, w1, b1, w2, b2, w3, b3):
    """x:[M,400] bf16; w*: bf16 padded to 128-wide; b*: f32 [1,128] -> [M,128]."""
    m, k1 = x.shape
    n1, n2, n3 = w1.shape[1], w2.shape[1], w3.shape[1]
    return pl.pallas_call(
        fc_stack_kernel,
        out_shape=jax.ShapeDtypeStruct((m, n3), jnp.float32),
        grid=(1,),
        in_specs=[_full((m, k1)),
                  _full((k1, n1)), _full((1, n1)),
                  _full((n1, n2)), _full((1, n2)),
                  _full((n2, n3)), _full((1, n3))],
        out_specs=_full((m, n3)),
        compiler_params=pltpu.CompilerParams(
            dimension_semantics=("arbitrary",),
            vmem_limit_bytes=32 * 1024 * 1024),
    )(x, w1, b1, w2, b2, w3, b3)


# ---------------------------------------------------------------------------
# Glue: channel-major pooled im2col (pure JAX reshuffle, no compute)
# ---------------------------------------------------------------------------
def im2col_pooled_stacked(x, k, pad):
    """x: [C, B, H, W] channel-major.

    Returns (cols, Hp, Wp, N): cols is [4*C*k*k, Npad] bf16 with the 4 pooling
    corner patch matrices stacked along the row (K) axis, corner order
    (di,dj) = (0,0),(0,1),(1,0),(1,1); columns ordered (b, i, j); N = B*Hp*Wp
    zero-padded to a multiple of 128 so kernel output tiles are lane-dense."""
    c, b, h, w = x.shape
    if pad:
        x = jnp.pad(x, ((0, 0), (0, 0), (pad, pad), (pad, pad)))
    ho = h + 2 * pad - k + 1
    wo = w + 2 * pad - k + 1
    hp, wp = ho // 2, wo // 2
    n = b * hp * wp
    npad = ((n + 127) // 128) * 128
    corners = []
    for di in range(2):
        for dj in range(2):
            slabs = []
            for kh in range(k):
                for kw in range(k):
                    s = x[:, :,
                          di + kh: di + kh + 2 * hp - 1: 2,
                          dj + kw: dj + kw + 2 * wp - 1: 2]      # [C, B, Hp, Wp]
                    slabs.append(s)
            p = jnp.stack(slabs, axis=1)                         # [C, k*k, B, Hp, Wp]
            corners.append(p.reshape(c * k * k, n))
    cols = jnp.concatenate(corners, axis=0)                      # [4*C*k*k, N]
    if npad != n:
        cols = jnp.pad(cols, ((0, 0), (0, npad - n)))
    return cols.astype(jnp.bfloat16), hp, wp, n


# ---------------------------------------------------------------------------
# Parameters (deterministic, synthetic) + one-time pre-layout
# ---------------------------------------------------------------------------
def init_params(key):
    ks = jax.random.split(key, 20)
    n = lambda k, s, sc=0.05: sc * jax.random.normal(k, s, dtype=jnp.float32)
    return {
        "w1": n(ks[0], (6, 3, 5, 5)), "b1": n(ks[1], (6,)),
        "g1": 1.0 + 0.1 * jax.random.normal(ks[2], (6,), jnp.float32),
        "be1": 0.1 * jax.random.normal(ks[3], (6,), jnp.float32),
        "m1": 0.1 * jax.random.normal(ks[4], (6,), jnp.float32),
        "v1": jax.random.uniform(ks[5], (6,), jnp.float32, 0.5, 1.5),
        "w2": n(ks[6], (16, 6, 5, 5)), "b2": n(ks[7], (16,)),
        "g2": 1.0 + 0.1 * jax.random.normal(ks[8], (16,), jnp.float32),
        "be2": 0.1 * jax.random.normal(ks[9], (16,), jnp.float32),
        "m2": 0.1 * jax.random.normal(ks[10], (16,), jnp.float32),
        "v2": jax.random.uniform(ks[11], (16,), jnp.float32, 0.5, 1.5),
        "fw1": n(ks[12], (120, 400)), "fb1": n(ks[13], (120,)),
        "fw2": n(ks[14], (84, 120)), "fb2": n(ks[15], (84,)),
        "fw3": n(ks[16], (10, 84)), "fb3": n(ks[17], (10,)),
    }


def _block_diag4(w):
    """[C, K] -> block-diagonal [4C, 4K] (one copy per pooling corner)."""
    c, k = w.shape
    out = jnp.zeros((4 * c, 4 * k), w.dtype)
    for i in range(4):
        out = out.at[i * c:(i + 1) * c, i * k:(i + 1) * k].set(w)
    return out


def _pad_to(a, shape):
    return jnp.pad(a, tuple((0, t - s) for s, t in zip(a.shape, shape)))


def prepare_params(p, eps=1e-5):
    """One-time weight re-layout / zero-padding (outside the jitted forward)."""
    s1 = p["g1"] / jnp.sqrt(p["v1"] + eps)
    s2 = p["g2"] / jnp.sqrt(p["v2"] + eps)
    w1c = _pad_to(p["w1"].reshape(6, -1), (8, 75))               # out-ch 6 -> 8
    w2c = p["w2"].reshape(16, -1)                                # 16 already dense
    return {
        "wbd1": _block_diag4(w1c).astype(jnp.bfloat16),          # [32, 300]
        "b1c": _pad_to(p["b1"], (8,)).reshape(8, 1),
        "scale1": _pad_to(s1, (8,)).reshape(8, 1),
        "shift1": _pad_to(p["be1"] - p["m1"] * s1, (8,)).reshape(8, 1),
        "wbd2": _block_diag4(w2c).astype(jnp.bfloat16),          # [64, 600]
        "b2c": p["b2"].reshape(16, 1),
        "scale2": s2.reshape(16, 1),
        "shift2": (p["be2"] - p["m2"] * s2).reshape(16, 1),
        # FC weights: transpose + pad every width to 128 lanes (zeros), bf16.
        "fw1t": _pad_to(p["fw1"].T, (400, 128)).astype(jnp.bfloat16),
        "fb1r": _pad_to(p["fb1"], (128,)).reshape(1, 128),
        "fw2t": _pad_to(p["fw2"].T, (128, 128)).astype(jnp.bfloat16),
        "fb2r": _pad_to(p["fb2"], (128,)).reshape(1, 128),
        "fw3t": _pad_to(p["fw3"].T, (128, 128)).astype(jnp.bfloat16),
        "fb3r": _pad_to(p["fb3"], (128,)).reshape(1, 128),
    }


# ---------------------------------------------------------------------------
# Forward pass (3 fused Pallas kernels, channel-major activations throughout)
# ---------------------------------------------------------------------------
def lenet_forward(x, q):
    b = x.shape[0]
    xc = jnp.transpose(x, (1, 0, 2, 3))                          # [3, B, 28, 28]

    # conv1: Conv2d(3,6,5,1,2)+ReLU+MaxPool2+BN(6) -> [8, N1pad] channel-major
    cols, hp, wp, n1 = im2col_pooled_stacked(xc, 5, 2)
    y = pallas_conv_pool_bn(cols, q["wbd1"], q["b1c"], q["scale1"], q["shift1"])
    y = y[:6, :n1].reshape(6, b, hp, wp)                         # no transpose

    # conv2: Conv2d(6,16,5)+ReLU+MaxPool2+BN(16)   -> [16, N2pad]
    cols, hp, wp, n2 = im2col_pooled_stacked(y, 5, 0)
    y = pallas_conv_pool_bn(cols, q["wbd2"], q["b2c"], q["scale2"], q["shift2"])

    # flatten to PyTorch view(B,-1) order (c,h,w): one tiny (16 x B*25) transpose
    xf = (y[:, :n2].reshape(16, b, hp * wp).transpose(1, 0, 2)
          .reshape(b, 16 * hp * wp).astype(jnp.bfloat16))

    # fc1(+ReLU) -> fc2(+ReLU, Dropout eval identity) -> fc3, one fused kernel
    out = pallas_fc_stack(xf, q["fw1t"], q["fb1r"], q["fw2t"], q["fb2r"],
                          q["fw3t"], q["fb3r"])                  # [B, 128]
    return out[:, :10]


# ---------------------------------------------------------------------------
# Pure-JAX reference for correctness check (f32 throughout)
# ---------------------------------------------------------------------------
def lenet_reference(x, p):
    def conv(x, w, b, pad):
        out = jax.lax.conv_general_dilated(
            x, w, (1, 1), [(pad, pad), (pad, pad)],
            dimension_numbers=("NCHW", "OIHW", "NCHW"))
        return out + b[None, :, None, None]

    def pool(x):
        bb, c, h, w = x.shape
        return x.reshape(bb, c, h // 2, 2, w // 2, 2).max(axis=(3, 5))

    def bn(x, g, b, m, v):
        return (x - m[None, :, None, None]) / jnp.sqrt(v[None, :, None, None] + 1e-5) \
            * g[None, :, None, None] + b[None, :, None, None]

    y = bn(pool(jnp.maximum(conv(x, p["w1"], p["b1"], 2), 0.0)),
           p["g1"], p["be1"], p["m1"], p["v1"])
    y = bn(pool(jnp.maximum(conv(y, p["w2"], p["b2"], 0), 0.0)),
           p["g2"], p["be2"], p["m2"], p["v2"])
    y = y.reshape(y.shape[0], -1)
    y = jnp.maximum(y @ p["fw1"].T + p["fb1"], 0.0)
    y = jnp.maximum(y @ p["fw2"].T + p["fb2"], 0.0)
    return y @ p["fw3"].T + p["fb3"]


if __name__ == "__main__":
    key = jax.random.PRNGKey(0)
    kx, kp = jax.random.split(key)
    # fc1 expects 400 = 16*5*5 features -> 3x28x28 input (32x32 would give 576)
    x = jax.random.normal(kx, (2, 3, 28, 28), dtype=jnp.float32)
    params = init_params(kp)
    prepped = prepare_params(params)          # one-time re-layout, outside jit

    out = jax.jit(lenet_forward)(x, prepped)
    out = jax.block_until_ready(out)

    ref = lenet_reference(x, params)
    assert out.shape == (2, 10), out.shape
    err = float(jnp.max(jnp.abs(out - ref)))
    # bf16 MXU operands with f32 accumulation: expected max-abs error ~1e-3..1e-2
    assert jnp.allclose(out, ref, atol=5e-2, rtol=5e-2), f"max abs err={err}"

    print("KERNEL_OK")
</pallas_src>

<mosaic_0001>
module attributes {stable_mosaic.version = 11 : i64} {
  func.func @conv_pool_bn_kernel(%arg0: i32, %arg1: memref<32x300xbf16, #tpu.memory_space<vmem>>, %arg2: memref<8x1xf32, #tpu.memory_space<vmem>>, %arg3: memref<8x1xf32, #tpu.memory_space<vmem>>, %arg4: memref<8x1xf32, #tpu.memory_space<vmem>>, %arg5: memref<300x512xbf16, #tpu.memory_space<vmem>>, %arg6: memref<8x512xf32, #tpu.memory_space<vmem>>) attributes {dimension_semantics = [#tpu.dimension_semantics<parallel>], iteration_bounds = array<i64: 1>, scalar_prefetch = 0 : i64, scratch_operands = 0 : i64, tpu.core_type = #tpu.core_type<tc>, window_params = [{pipeline_mode = #tpu.pipeline_mode<synchronous>, transform_indices = @transform_0, window_bounds = array<i64: 32, 300>}, {pipeline_mode = #tpu.pipeline_mode<synchronous>, transform_indices = @transform_1, window_bounds = array<i64: 8, 1>}, {pipeline_mode = #tpu.pipeline_mode<synchronous>, transform_indices = @transform_2, window_bounds = array<i64: 8, 1>}, {pipeline_mode = #tpu.pipeline_mode<synchronous>, transform_indices = @transform_3, window_bounds = array<i64: 8, 1>}, {transform_indices = @transform_4, window_bounds = array<i64: 300, 512>}, {transform_indices = @transform_5, window_bounds = array<i64: 8, 512>}]} {
    %c0 = arith.constant 0 : index
    %c0_0 = arith.constant 0 : index
    %0 = vector.load %arg1[%c0, %c0_0] : memref<32x300xbf16, #tpu.memory_space<vmem>>, vector<32x300xbf16>
    %c0_1 = arith.constant 0 : index
    %c0_2 = arith.constant 0 : index
    %1 = vector.load %arg5[%c0_1, %c0_2] : memref<300x512xbf16, #tpu.memory_space<vmem>>, vector<300x512xbf16>
    %cst = arith.constant dense<0.000000e+00> : vector<32x512xf32>
    %2 = tpu.matmul %0, %1, %cst {dimension_numbers = #tpu.dot_dimension_numbers<[1], [0], [0], [1], [0, 0, 1, 1], [], []>} : vector<32x300xbf16>, vector<300x512xbf16>, vector<32x512xf32> -> vector<32x512xf32>
    %3 = vector.extract_strided_slice %2 {offsets = [0, 0], sizes = [8, 512], strides = [1, 1]} : vector<32x512xf32> to vector<8x512xf32>
    %4 = vector.extract_strided_slice %2 {offsets = [8, 0], sizes = [8, 512], strides = [1, 1]} : vector<32x512xf32> to vector<8x512xf32>
    %5 = arith.maximumf %3, %4 : vector<8x512xf32>
    %6 = vector.extract_strided_slice %2 {offsets = [16, 0], sizes = [8, 512], strides = [1, 1]} : vector<32x512xf32> to vector<8x512xf32>
    %7 = vector.extract_strided_slice %2 {offsets = [24, 0], sizes = [8, 512], strides = [1, 1]} : vector<32x512xf32> to vector<8x512xf32>
    %8 = arith.maximumf %6, %7 : vector<8x512xf32>
    %9 = arith.maximumf %5, %8 : vector<8x512xf32>
    %c0_3 = arith.constant 0 : index
    %c0_4 = arith.constant 0 : index
    %10 = vector.load %arg2[%c0_3, %c0_4] : memref<8x1xf32, #tpu.memory_space<vmem>>, vector<8x1xf32>
    %11 = vector.broadcast %10 : vector<8x1xf32> to vector<8x512xf32>
    %12 = arith.addf %9, %11 : vector<8x512xf32>
    %cst_5 = arith.constant 0.000000e+00 : f32
    %13 = vector.broadcast %cst_5 : f32 to vector<8x512xf32>
    %14 = arith.maximumf %12, %13 : vector<8x512xf32>
    %c0_6 = arith.constant 0 : index
    %c0_7 = arith.constant 0 : index
    %15 = vector.load %arg3[%c0_6, %c0_7] : memref<8x1xf32, #tpu.memory_space<vmem>>, vector<8x1xf32>
    %16 = vector.broadcast %15 : vector<8x1xf32> to vector<8x512xf32>
    %17 = arith.mulf %14, %16 : vector<8x512xf32>
    %c0_8 = arith.constant 0 : index
    %c0_9 = arith.constant 0 : index
    %18 = vector.load %arg4[%c0_8, %c0_9] : memref<8x1xf32, #tpu.memory_space<vmem>>, vector<8x1xf32>
    %19 = vector.broadcast %18 : vector<8x1xf32> to vector<8x512xf32>
    %20 = arith.addf %17, %19 : vector<8x512xf32>
    %c0_10 = arith.constant 0 : index
    %c0_11 = arith.constant 0 : index
    %21 = vector.load %arg6[%c0_10, %c0_11] : memref<8x512xf32, #tpu.memory_space<vmem>>, vector<8x512xf32>
    tpu.vector_store %arg6[%c0_10, %c0_11], %20 {strides = array<i32>} : memref<8x512xf32, #tpu.memory_space<vmem>>, vector<8x512xf32>,
    return
  }
  func.func @transform_0(%arg0: i32) -> (i32, i32) {
    %c0_i32 = arith.constant 0 : i32
    %c0_i32_0 = arith.constant 0 : i32
    %c0_i32_1 = arith.constant 0 : i32
    return %c0_i32, %c0_i32_0 : i32, i32
  }
  func.func @transform_1(%arg0: i32) -> (i32, i32) {
    %c0_i32 = arith.constant 0 : i32
    %c0_i32_0 = arith.constant 0 : i32
    %c0_i32_1 = arith.constant 0 : i32
    return %c0_i32, %c0_i32_0 : i32, i32
  }
  func.func @transform_2(%arg0: i32) -> (i32, i32) {
    %c0_i32 = arith.constant 0 : i32
    %c0_i32_0 = arith.constant 0 : i32
    %c0_i32_1 = arith.constant 0 : i32
    return %c0_i32, %c0_i32_0 : i32, i32
  }
  func.func @transform_3(%arg0: i32) -> (i32, i32) {
    %c0_i32 = arith.constant 0 : i32
    %c0_i32_0 = arith.constant 0 : i32
    %c0_i32_1 = arith.constant 0 : i32
    return %c0_i32, %c0_i32_0 : i32, i32
  }
  func.func @transform_4(%arg0: i32) -> (i32, i32) {
    %c0_i32 = arith.constant 0 : i32
    %c0_i32_0 = arith.constant 0 : i32
    return %c0_i32, %arg0 : i32, i32
  }
  func.func @transform_5(%arg0: i32) -> (i32, i32) {
    %c0_i32 = arith.constant 0 : i32
    %c0_i32_0 = arith.constant 0 : i32
    return %c0_i32, %arg0 : i32, i32
  }
}

module attributes {stable_mosaic.version = 11 : i64} {
  func.func @conv_pool_bn_kernel(%arg0: i32, %arg1: memref<64x600xbf16, #tpu.memory_space<vmem>>, %arg2: memref<16x1xf32, #tpu.memory_space<vmem>>, %arg3: memref<16x1xf32, #tpu.memory_space<vmem>>, %arg4: memref<16x1xf32, #tpu.memory_space<vmem>>, %arg5: memref<600x128xbf16, #tpu.memory_space<vmem>>, %arg6: memref<16x128xf32, #tpu.memory_space<vmem>>) attributes {dimension_semantics = [#tpu.dimension_semantics<parallel>], iteration_bounds = array<i64: 1>, scalar_prefetch = 0 : i64, scratch_operands = 0 : i64, tpu.core_type = #tpu.core_type<tc>, window_params = [{pipeline_mode = #tpu.pipeline_mode<synchronous>, transform_indices = @transform_0, window_bounds = array<i64: 64, 600>}, {pipeline_mode = #tpu.pipeline_mode<synchronous>, transform_indices = @transform_1, window_bounds = array<i64: 16, 1>}, {pipeline_mode = #tpu.pipeline_mode<synchronous>, transform_indices = @transform_2, window_bounds = array<i64: 16, 1>}, {pipeline_mode = #tpu.pipeline_mode<synchronous>, transform_indices = @transform_3, window_bounds = array<i64: 16, 1>}, {transform_indices = @transform_4, window_bounds = array<i64: 600, 128>}, {transform_indices = @transform_5, window_bounds = array<i64: 16, 128>}]} {
    %c0 = arith.constant 0 : index
    %c0_0 = arith.constant 0 : index
    %0 = vector.load %arg1[%c0, %c0_0] : memref<64x600xbf16, #tpu.memory_space<vmem>>, vector<64x600xbf16>
    %c0_1 = arith.constant 0 : index
    %c0_2 = arith.constant 0 : index
    %1 = vector.load %arg5[%c0_1, %c0_2] : memref<600x128xbf16, #tpu.memory_space<vmem>>, vector<600x128xbf16>
    %cst = arith.constant dense<0.000000e+00> : vector<64x128xf32>
    %2 = tpu.matmul %0, %1, %cst {dimension_numbers = #tpu.dot_dimension_numbers<[1], [0], [0], [1], [0, 0, 1, 1], [], []>} : vector<64x600xbf16>, vector<600x128xbf16>, vector<64x128xf32> -> vector<64x128xf32>
    %3 = vector.extract_strided_slice %2 {offsets = [0, 0], sizes = [16, 128], strides = [1, 1]} : vector<64x128xf32> to vector<16x128xf32>
    %4 = vector.extract_strided_slice %2 {offsets = [16, 0], sizes = [16, 128], strides = [1, 1]} : vector<64x128xf32> to vector<16x128xf32>
    %5 = arith.maximumf %3, %4 : vector<16x128xf32>
    %6 = vector.extract_strided_slice %2 {offsets = [32, 0], sizes = [16, 128], strides = [1, 1]} : vector<64x128xf32> to vector<16x128xf32>
    %7 = vector.extract_strided_slice %2 {offsets = [48, 0], sizes = [16, 128], strides = [1, 1]} : vector<64x128xf32> to vector<16x128xf32>
    %8 = arith.maximumf %6, %7 : vector<16x128xf32>
    %9 = arith.maximumf %5, %8 : vector<16x128xf32>
    %c0_3 = arith.constant 0 : index
    %c0_4 = arith.constant 0 : index
    %10 = vector.load %arg2[%c0_3, %c0_4] : memref<16x1xf32, #tpu.memory_space<vmem>>, vector<16x1xf32>
    %11 = vector.broadcast %10 : vector<16x1xf32> to vector<16x128xf32>
    %12 = arith.addf %9, %11 : vector<16x128xf32>
    %cst_5 = arith.constant 0.000000e+00 : f32
    %13 = vector.broadcast %cst_5 : f32 to vector<16x128xf32>
    %14 = arith.maximumf %12, %13 : vector<16x128xf32>
    %c0_6 = arith.constant 0 : index
    %c0_7 = arith.constant 0 : index
    %15 = vector.load %arg3[%c0_6, %c0_7] : memref<16x1xf32, #tpu.memory_space<vmem>>, vector<16x1xf32>
    %16 = vector.broadcast %15 : vector<16x1xf32> to vector<16x128xf32>
    %17 = arith.mulf %14, %16 : vector<16x128xf32>
    %c0_8 = arith.constant 0 : index
    %c0_9 = arith.constant 0 : index
    %18 = vector.load %arg4[%c0_8, %c0_9] : memref<16x1xf32, #tpu.memory_space<vmem>>, vector<16x1xf32>
    %19 = vector.broadcast %18 : vector<16x1xf32> to vector<16x128xf32>
    %20 = arith.addf %17, %19 : vector<16x128xf32>
    %c0_10 = arith.constant 0 : index
    %c0_11 = arith.constant 0 : index
    %21 = vector.load %arg6[%c0_10, %c0_11] : memref<16x128xf32, #tpu.memory_space<vmem>>, vector<16x128xf32>
    tpu.vector_store %arg6[%c0_10, %c0_11], %20 {strides = array<i32>} : memref<16x128xf32, #tpu.memory_space<vmem>>, vector<16x128xf32>,
    return
  }
  func.func @transform_0(%arg0: i32) -> (i32, i32) {
    %c0_i32 = arith.constant 0 : i32
    %c0_i32_0 = arith.constant 0 : i32
    %c0_i32_1 = arith.constant 0 : i32
    return %c0_i32, %c0_i32_0 : i32, i32
  }
  func.func @transform_1(%arg0: i32) -> (i32, i32) {
    %c0_i32 = arith.constant 0 : i32
    %c0_i32_0 = arith.constant 0 : i32
    %c0_i32_1 = arith.constant 0 : i32
    return %c0_i32, %c0_i32_0 : i32, i32
  }
  func.func @transform_2(%arg0: i32) -> (i32, i32) {
    %c0_i32 = arith.constant 0 : i32
    %c0_i32_0 = arith.constant 0 : i32
    %c0_i32_1 = arith.constant 0 : i32
    return %c0_i32, %c0_i32_0 : i32, i32
  }
  func.func @transform_3(%arg0: i32) -> (i32, i32) {
    %c0_i32 = arith.constant 0 : i32
    %c0_i32_0 = arith.constant 0 : i32
    %c0_i32_1 = arith.constant 0 : i32
    return %c0_i32, %c0_i32_0 : i32, i32
  }
  func.func @transform_4(%arg0: i32) -> (i32, i32) {
    %c0_i32 = arith.constant 0 : i32
    %c0_i32_0 = arith.constant 0 : i32
    return %c0_i32, %arg0 : i32, i32
  }
  func.func @transform_5(%arg0: i32) -> (i32, i32) {
    %c0_i32 = arith.constant 0 : i32
    %c0_i32_0 = arith.constant 0 : i32
    return %c0_i32, %arg0 : i32, i32
  }
}

module attributes {stable_mosaic.version = 11 : i64} {
  func.func @fc_stack_kernel(%arg0: i32, %arg1: memref<2x400xbf16, #tpu.memory_space<vmem>>, %arg2: memref<400x128xbf16, #tpu.memory_space<vmem>>, %arg3: memref<1x128xf32, #tpu.memory_space<vmem>>, %arg4: memref<128x128xbf16, #tpu.memory_space<vmem>>, %arg5: memref<1x128xf32, #tpu.memory_space<vmem>>, %arg6: memref<128x128xbf16, #tpu.memory_space<vmem>>, %arg7: memref<1x128xf32, #tpu.memory_space<vmem>>, %arg8: memref<2x128xf32, #tpu.memory_space<vmem>>) attributes {dimension_semantics = [#tpu.dimension_semantics<arbitrary>], iteration_bounds = array<i64: 1>, scalar_prefetch = 0 : i64, scratch_operands = 0 : i64, tpu.core_type = #tpu.core_type<tc>, window_params = [{pipeline_mode = #tpu.pipeline_mode<synchronous>, transform_indices = @transform_0, window_bounds = array<i64: 2, 400>}, {pipeline_mode = #tpu.pipeline_mode<synchronous>, transform_indices = @transform_1, window_bounds = array<i64: 400, 128>}, {pipeline_mode = #tpu.pipeline_mode<synchronous>, transform_indices = @transform_2, window_bounds = array<i64: 1, 128>}, {pipeline_mode = #tpu.pipeline_mode<synchronous>, transform_indices = @transform_3, window_bounds = array<i64: 128, 128>}, {pipeline_mode = #tpu.pipeline_mode<synchronous>, transform_indices = @transform_4, window_bounds = array<i64: 1, 128>}, {pipeline_mode = #tpu.pipeline_mode<synchronous>, transform_indices = @transform_5, window_bounds = array<i64: 128, 128>}, {pipeline_mode = #tpu.pipeline_mode<synchronous>, transform_indices = @transform_6, window_bounds = array<i64: 1, 128>}, {pipeline_mode = #tpu.pipeline_mode<synchronous>, transform_indices = @transform_7, window_bounds = array<i64: 2, 128>}]} {
    %c0 = arith.constant 0 : index
    %c0_0 = arith.constant 0 : index
    %0 = vector.load %arg1[%c0, %c0_0] : memref<2x400xbf16, #tpu.memory_space<vmem>>, vector<2x400xbf16>
    %c0_1 = arith.constant 0 : index
    %c0_2 = arith.constant 0 : index
    %1 = vector.load %arg2[%c0_1, %c0_2] : memref<400x128xbf16, #tpu.memory_space<vmem>>, vector<400x128xbf16>
    %cst = arith.constant dense<0.000000e+00> : vector<2x128xf32>
    %2 = tpu.matmul %0, %1, %cst {dimension_numbers = #tpu.dot_dimension_numbers<[1], [0], [0], [1], [0, 0, 1, 1], [], []>} : vector<2x400xbf16>, vector<400x128xbf16>, vector<2x128xf32> -> vector<2x128xf32>
    %c0_3 = arith.constant 0 : index
    %c0_4 = arith.constant 0 : index
    %3 = vector.load %arg3[%c0_3, %c0_4] : memref<1x128xf32, #tpu.memory_space<vmem>>, vector<1x128xf32>
    %4 = vector.broadcast %3 : vector<1x128xf32> to vector<2x128xf32>
    %5 = arith.addf %2, %4 : vector<2x128xf32>
    %cst_5 = arith.constant 0.000000e+00 : f32
    %6 = vector.broadcast %cst_5 : f32 to vector<2x128xf32>
    %7 = arith.maximumf %5, %6 : vector<2x128xf32>
    %8 = arith.truncf %7 : vector<2x128xf32> to vector<2x128xbf16>
    %c0_6 = arith.constant 0 : index
    %c0_7 = arith.constant 0 : index
    %9 = vector.load %arg4[%c0_6, %c0_7] : memref<128x128xbf16, #tpu.memory_space<vmem>>, vector<128x128xbf16>
    %cst_8 = arith.constant dense<0.000000e+00> : vector<2x128xf32>
    %10 = tpu.matmul %8, %9, %cst_8 {dimension_numbers = #tpu.dot_dimension_numbers<[1], [0], [0], [1], [0, 0, 1, 1], [], []>} : vector<2x128xbf16>, vector<128x128xbf16>, vector<2x128xf32> -> vector<2x128xf32>
    %c0_9 = arith.constant 0 : index
    %c0_10 = arith.constant 0 : index
    %11 = vector.load %arg5[%c0_9, %c0_10] : memref<1x128xf32, #tpu.memory_space<vmem>>, vector<1x128xf32>
    %12 = vector.broadcast %11 : vector<1x128xf32> to vector<2x128xf32>
    %13 = arith.addf %10, %12 : vector<2x128xf32>
    %cst_11 = arith.constant 0.000000e+00 : f32
    %14 = vector.broadcast %cst_11 : f32 to vector<2x128xf32>
    %15 = arith.maximumf %13, %14 : vector<2x128xf32>
    %16 = arith.truncf %15 : vector<2x128xf32> to vector<2x128xbf16>
    %c0_12 = arith.constant 0 : index
    %c0_13 = arith.constant 0 : index
    %17 = vector.load %arg6[%c0_12, %c0_13] : memref<128x128xbf16, #tpu.memory_space<vmem>>, vector<128x128xbf16>
    %cst_14 = arith.constant dense<0.000000e+00> : vector<2x128xf32>
    %18 = tpu.matmul %16, %17, %cst_14 {dimension_numbers = #tpu.dot_dimension_numbers<[1], [0], [0], [1], [0, 0, 1, 1], [], []>} : vector<2x128xbf16>, vector<128x128xbf16>, vector<2x128xf32> -> vector<2x128xf32>
    %c0_15 = arith.constant 0 : index
    %c0_16 = arith.constant 0 : index
    %19 = vector.load %arg7[%c0_15, %c0_16] : memref<1x128xf32, #tpu.memory_space<vmem>>, vector<1x128xf32>
    %20 = vector.broadcast %19 : vector<1x128xf32> to vector<2x128xf32>
    %21 = arith.addf %18, %20 : vector<2x128xf32>
    %c0_17 = arith.constant 0 : index
    %c0_18 = arith.constant 0 : index
    %22 = vector.load %arg8[%c0_17, %c0_18] : memref<2x128xf32, #tpu.memory_space<vmem>>, vector<2x128xf32>
    tpu.vector_store %arg8[%c0_17, %c0_18], %21 {strides = array<i32>} : memref<2x128xf32, #tpu.memory_space<vmem>>, vector<2x128xf32>,
    return
  }
  func.func @transform_0(%arg0: i32) -> (i32, i32) {
    %c0_i32 = arith.constant 0 : i32
    %c0_i32_0 = arith.constant 0 : i32
    %c0_i32_1 = arith.constant 0 : i32
    return %c0_i32, %c0_i32_0 : i32, i32
  }
  func.func @transform_1(%arg0: i32) -> (i32, i32) {
    %c0_i32 = arith.constant 0 : i32
    %c0_i32_0 = arith.constant 0 : i32
    %c0_i32_1 = arith.constant 0 : i32
    return %c0_i32, %c0_i32_0 : i32, i32
  }
  func.func @transform_2(%arg0: i32) -> (i32, i32) {
    %c0_i32 = arith.constant 0 : i32
    %c0_i32_0 = arith.constant 0 : i32
    %c0_i32_1 = arith.constant 0 : i32
    return %c0_i32, %c0_i32_0 : i32, i32
  }
  func.func @transform_3(%arg0: i32) -> (i32, i32) {
    %c0_i32 = arith.constant 0 : i32
    %c0_i32_0 = arith.constant 0 : i32
    %c0_i32_1 = arith.constant 0 : i32
    return %c0_i32, %c0_i32_0 : i32, i32
  }
  func.func @transform_4(%arg0: i32) -> (i32, i32) {
    %c0_i32 = arith.constant 0 : i32
    %c0_i32_0 = arith.constant 0 : i32
    %c0_i32_1 = arith.constant 0 : i32
    return %c0_i32, %c0_i32_0 : i32, i32
  }
  func.func @transform_5(%arg0: i32) -> (i32, i32) {
    %c0_i32 = arith.constant 0 : i32
    %c0_i32_0 = arith.constant 0 : i32
    %c0_i32_1 = arith.constant 0 : i32
    return %c0_i32, %c0_i32_0 : i32, i32
  }
  func.func @transform_6(%arg0: i32) -> (i32, i32) {
    %c0_i32 = arith.constant 0 : i32
    %c0_i32_0 = arith.constant 0 : i32
    %c0_i32_1 = arith.constant 0 : i32
    return %c0_i32, %c0_i32_0 : i32, i32
  }
  func.func @transform_7(%arg0: i32) -> (i32, i32) {
    %c0_i32 = arith.constant 0 : i32
    %c0_i32_0 = arith.constant 0 : i32
    %c0_i32_1 = arith.constant 0 : i32
    return %c0_i32, %c0_i32_0 : i32, i32
  }
}

</mosaic_0001>

<llo_original>
// kernel: lenet_forward.3
$region0: #{lenet_forward.3}
  #allocation0 [shape = 'u32[]', space=smem, size = 0x4, offset = 0x4, fixed_abs, tag = 'smem constant byte address 0x4 - core index']
  #allocation1 [shape = 'u32[72,128]{1,0:T(1,128)}', space=vmem, size = 0x9000, scoped, tag = 'internal scratch']
  %s0 = inlined_call_operand.vmem [shape: bf16[32,300], index: 0, kind: input, shape index: {}]
  %s1 = inlined_call_operand.vmem [shape: f32[8,1], index: 1, kind: input, shape index: {}]
  %s2 = inlined_call_operand.vmem [shape: f32[8,1], index: 2, kind: input, shape index: {}]
  %s3 = inlined_call_operand.vmem [shape: f32[8,1], index: 3, kind: input, shape index: {}]
  %s4 = inlined_call_operand.vmem [shape: bf16[300,512], index: 4, kind: input, shape index: {}]
  %s5 = inlined_call_operand.vmem [shape: f32[8,512], index: 5, kind: output, shape index: {}]
  %s6 = sld [smem:[#allocation0]]
  $region30: #{lenet_forward.3} parent=0
    _
  %s8 = ssub.s32 1, %s6
  %s9 = scalar_select 0, %s8, %s6
  // Predicated region
  $region2: #{lenet_forward.3} parent=0 // pred_check
    _
  $region3: #{lenet_forward.3} parent=0 // pred_check_branch
    %11 = sbr.rel (0) target = $region5
  $region4: #{lenet_forward.3} parent=0 // pred_region
    _
  $region5: #{lenet_forward.3} parent=0 // pred_fallthru
    _
  // Predicated region
  $region6: #{lenet_forward.3} parent=0 // pred_check
    _
  $region7: #{lenet_forward.3} parent=0 // pred_check_branch
    %13 = sbr.rel (0) target = $region9
  $region8: #{lenet_forward.3} parent=0 // pred_region
    _
  $region9: #{lenet_forward.3} parent=0 // pred_fallthru
    _
  // Predicated region
  $region10: #{lenet_forward.3} parent=0 // pred_check
    _
  $region11: #{lenet_forward.3} parent=0 // pred_check_branch
    %15 = sbr.rel (0) target = $region13
  $region12: #{lenet_forward.3} parent=0 // pred_region
    _
  $region13: #{lenet_forward.3} parent=0 // pred_fallthru
    _
  // Predicated region
  $region14: #{lenet_forward.3} parent=0 // pred_check
    _
  $region15: #{lenet_forward.3} parent=0 // pred_check_branch
    %17 = sbr.rel (0) target = $region17
  $region16: #{lenet_forward.3} parent=0 // pred_region
    _
  $region17: #{lenet_forward.3} parent=0 // pred_fallthru
    _
  // Predicated region
  $region18: #{lenet_forward.3} parent=0 // pred_check
    _
  $region19: #{lenet_forward.3} parent=0 // pred_check_branch
    %19 = sbr.rel (0) target = $region21
  $region20: #{lenet_forward.3} parent=0 // pred_region
    _
  $region21: #{lenet_forward.3} parent=0 // pred_fallthru
    _
  %v21 = vld [vmem:[%s0] sm:$0xff]
  %v22 = vld [vmem:[%s0 + $0x8] sm:$0xf]
  %v23 = vld [vmem:[%s0 + $0xc] sm:$0xff]
  %v24 = vld [vmem:[%s0 + $0x14] sm:$0xf]
  %v25 = vld [vmem:[%s0 + $0x18] sm:$0xff]
  %v26 = vld [vmem:[%s0 + $0x20] sm:$0xf]
  %v27 = vld [vmem:[%s0 + $0x24] sm:$0xff]
  %v28 = vld [vmem:[%s0 + $0x2c] sm:$0xf]
  %v29 = vld [vmem:[%s4] sm:$0xff]
  %v30 = vld [vmem:[%s4 + $0x8] sm:$0xff]
  %v31 = vld [vmem:[%s4 + $0x10] sm:$0xff]
  %v32 = vld [vmem:[%s4 + $0x18] sm:$0xff]
  %v33 = vld [vmem:[%s4 + $0x20] sm:$0xff]
  %v34 = vld [vmem:[%s4 + $0x28] sm:$0xff]
  %v35 = vld [vmem:[%s4 + $0x30] sm:$0xff]
  %v36 = vld [vmem:[%s4 + $0x38] sm:$0xff]
  %v37 = vld [vmem:[%s4 + $0x40] sm:$0xff]
  %v38 = vld [vmem:[%s4 + $0x48] sm:$0xff]
  %v39 = vld [vmem:[%s4 + $0x50] sm:$0xff]
  %v40 = vld [vmem:[%s4 + $0x58] sm:$0xff]
  %v41 = vld [vmem:[%s4 + $0x60] sm:$0xff]
  %v42 = vld [vmem:[%s4 + $0x68] sm:$0xff]
  %v43 = vld [vmem:[%s4 + $0x70] sm:$0xff]
  %v44 = vld [vmem:[%s4 + $0x78] sm:$0xff]
  %v45 = vld [vmem:[%s4 + $0x80] sm:$0xff]
  %v46 = vld [vmem:[%s4 + $0x88] sm:$0xff]
  %v47 = vld [vmem:[%s4 + $0x90] sm:$0xff]
  %v48 = vld [vmem:[%s4 + $0x98] sm:$0xff]
  %v49 = vld [vmem:[%s4 + $0xa0] sm:$0xff]
  %v50 = vld [vmem:[%s4 + $0xa8] sm:$0xff]
  %v51 = vld [vmem:[%s4 + $0xb0] sm:$0xff]
  %v52 = vld [vmem:[%s4 + $0xb8] sm:$0xff]
  %v53 = vld [vmem:[%s4 + $0xc0] sm:$0xff]
  %v54 = vld [vmem:[%s4 + $0xc8] sm:$0xff]
  %v55 = vld [vmem:[%s4 + $0xd0] sm:$0xff]
  %v56 = vld [vmem:[%s4 + $0xd8] sm:$0xff]
  %v57 = vld [vmem:[%s4 + $0xe0] sm:$0xff]
  %v58 = vld [vmem:[%s4 + $0xe8] sm:$0xff]
  %v59 = vld [vmem:[%s4 + $0xf0] sm:$0xff]
  %v60 = vld [vmem:[%s4 + $0xf8] sm:$0xff]
  %v61 = vld [vmem:[%s4 + $0x100] sm:$0xff]
  %v62 = vld [vmem:[%s4 + $0x108] sm:$0xff]
  %v63 = vld [vmem:[%s4 + $0x110] sm:$0xff]
  %v64 = vld [vmem:[%s4 + $0x118] sm:$0xff]
  %v65 = vld [vmem:[%s4 + $0x120] sm:$0xff]
  %v66 = vld [vmem:[%s4 + $0x128] sm:$0xff]
  %v67 = vld [vmem:[%s4 + $0x130] sm:$0xff]
  %v68 = vld [vmem:[%s4 + $0x138] sm:$0xff]
  %v69 = vld [vmem:[%s4 + $0x140] sm:$0xff]
  %v70 = vld [vmem:[%s4 + $0x148] sm:$0xff]
  %v71 = vld [vmem:[%s4 + $0x150] sm:$0xff]
  %v72 = vld [vmem:[%s4 + $0x158] sm:$0xff]
  %v73 = vld [vmem:[%s4 + $0x160] sm:$0xff]
  %v74 = vld [vmem:[%s4 + $0x168] sm:$0xff]
  %v75 = vld [vmem:[%s4 + $0x170] sm:$0xff]
  %v76 = vld [vmem:[%s4 + $0x178] sm:$0xff]
  %v77 = vld [vmem:[%s4 + $0x180] sm:$0xff]
  %v78 = vld [vmem:[%s4 + $0x188] sm:$0xff]
  %v79 = vld [vmem:[%s4 + $0x190] sm:$0xff]
  %v80 = vld [vmem:[%s4 + $0x198] sm:$0xff]
  %v81 = vld [vmem:[%s4 + $0x1a0] sm:$0xff]
  %v82 = vld [vmem:[%s4 + $0x1a8] sm:$0xff]
  %v83 = vld [vmem:[%s4 + $0x1b0] sm:$0xff]
  %v84 = vld [vmem:[%s4 + $0x1b8] sm:$0xff]
  %v85 = vld [vmem:[%s4 + $0x1c0] sm:$0xff]
  %v86 = vld [vmem:[%s4 + $0x1c8] sm:$0xff]
  %v87 = vld [vmem:[%s4 + $0x1d0] sm:$0xff]
  %v88 = vld [vmem:[%s4 + $0x1d8] sm:$0xff]
  %v89 = vld [vmem:[%s4 + $0x1e0] sm:$0xff]
  %v90 = vld [vmem:[%s4 + $0x1e8] sm:$0xff]
  %v91 = vld [vmem:[%s4 + $0x1f0] sm:$0xff]
  %v92 = vld [vmem:[%s4 + $0x1f8] sm:$0xff]
  %v93 = vld [vmem:[%s4 + $0x200] sm:$0xff]
  %v94 = vld [vmem:[%s4 + $0x208] sm:$0xff]
  %v95 = vld [vmem:[%s4 + $0x210] sm:$0xff]
  %v96 = vld [vmem:[%s4 + $0x218] sm:$0xff]
  %v97 = vld [vmem:[%s4 + $0x220] sm:$0xff]
  %v98 = vld [vmem:[%s4 + $0x228] sm:$0xff]
  %v99 = vld [vmem:[%s4 + $0x230] sm:$0xff]
  %v100 = vld [vmem:[%s4 + $0x238] sm:$0xff]
  %v101 = vld [vmem:[%s4 + $0x240] sm:$0xff]
  %v102 = vld [vmem:[%s4 + $0x248] sm:$0xff]
  %v103 = vld [vmem:[%s4 + $0x250] sm:$0x33]
  %v104 = vld [vmem:[%s4 + $0x258] sm:$0x33]
  %v113 = vunpack.c.l.b16 %v21
  %v114 = vunpack.c.h.b16 %v21
  %v115 = vunpack.c.l.b16 %v22
  %v116 = vunpack.c.l.b16 %v23
  %v117 = vunpack.c.h.b16 %v23
  %v118 = vunpack.c.l.b16 %v24
  %v119 = vunpack.c.l.b16 %v25
  %v120 = vunpack.c.h.b16 %v25
  %v121 = vunpack.c.l.b16 %v26
  %v122 = vunpack.c.l.b16 %v27
  %v123 = vunpack.c.h.b16 %v27
  %v124 = vunpack.c.l.b16 %v28
  %v125 = vpack.c.b16 %v116, %v113
  %v126 = vpack.c.b16 %v117, %v114
  %v127 = vpack.c.b16 %v118, %v115
  %v128 = vpack.c.b16 %v122, %v119
  %v129 = vpack.c.b16 %v123, %v120
  %v130 = vpack.c.b16 %v124, %v121
  %v211 = vunpack.c.l.b16 %v29
  %v212 = vunpack.c.h.b16 %v29
  %v213 = vunpack.c.l.b16 %v30
  %v214 = vunpack.c.h.b16 %v30
  %v215 = vunpack.c.l.b16 %v31
  %v216 = vunpack.c.h.b16 %v31
  %v217 = vunpack.c.l.b16 %v32
  %v218 = vunpack.c.h.b16 %v32
  %v219 = vunpack.c.l.b16 %v33
  %v220 = vunpack.c.h.b16 %v33
  %v221 = vunpack.c.l.b16 %v34
  %v222 = vunpack.c.h.b16 %v34
  %v223 = vunpack.c.l.b16 %v35
  %v224 = vunpack.c.h.b16 %v35
  %v225 = vunpack.c.l.b16 %v36
  %v226 = vunpack.c.h.b16 %v36
  %v227 = vunpack.c.l.b16 %v37
  %v228 = vunpack.c.h.b16 %v37
  %v229 = vunpack.c.l.b16 %v38
  %v230 = vunpack.c.h.b16 %v38
  %v231 = vunpack.c.l.b16 %v39
  %v232 = vunpack.c.h.b16 %v39
  %v233 = vunpack.c.l.b16 %v40
  %v234 = vunpack.c.h.b16 %v40
  %v235 = vunpack.c.l.b16 %v41
  %v236 = vunpack.c.h.b16 %v41
  %v237 = vunpack.c.l.b16 %v42
  %v238 = vunpack.c.h.b16 %v42
  %v239 = vunpack.c.l.b16 %v43
  %v240 = vunpack.c.h.b16 %v43
  %v241 = vunpack.c.l.b16 %v44
  %v242 = vunpack.c.h.b16 %v44
  %v243 = vunpack.c.l.b16 %v45
  %v244 = vunpack.c.h.b16 %v45
  %v245 = vunpack.c.l.b16 %v46
  %v246 = vunpack.c.h.b16 %v46
  %v247 = vunpack.c.l.b16 %v47
  %v248 = vunpack.c.h.b16 %v47
  %v249 = vunpack.c.l.b16 %v48
  %v250 = vunpack.c.h.b16 %v48
  %v251 = vunpack.c.l.b16 %v49
  %v252 = vunpack.c.h.b16 %v49
  %v253 = vunpack.c.l.b16 %v50
  %v254 = vunpack.c.h.b16 %v50
  %v255 = vunpack.c.l.b16 %v51
  %v256 = vunpack.c.h.b16 %v51
  %v257 = vunpack.c.l.b16 %v52
  %v258 = vunpack.c.h.b16 %v52
  %v259 = vunpack.c.l.b16 %v53
  %v260 = vunpack.c.h.b16 %v53
  %v261 = vunpack.c.l.b16 %v54
  %v262 = vunpack.c.h.b16 %v54
  %v263 = vunpack.c.l.b16 %v55
  %v264 = vunpack.c.h.b16 %v55
  %v265 = vunpack.c.l.b16 %v56
  %v266 = vunpack.c.h.b16 %v56
  %v267 = vunpack.c.l.b16 %v57
  %v268 = vunpack.c.h.b16 %v57
  %v269 = vunpack.c.l.b16 %v58
  %v270 = vunpack.c.h.b16 %v58
  %v271 = vunpack.c.l.b16 %v59
  %v272 = vunpack.c.h.b16 %v59
  %v273 = vunpack.c.l.b16 %v60
  %v274 = vunpack.c.h.b16 %v60
  %v275 = vunpack.c.l.b16 %v61
  %v276 = vunpack.c.h.b16 %v61
  %v277 = vunpack.c.l.b16 %v62
  %v278 = vunpack.c.h.b16 %v62
  %v279 = vunpack.c.l.b16 %v63
  %v280 = vunpack.c.h.b16 %v63
  %v281 = vunpack.c.l.b16 %v64
  %v282 = vunpack.c.h.b16 %v64
  %v283 = vunpack.c.l.b16 %v65
  %v284 = vunpack.c.h.b16 %v65
  %v285 = vunpack.c.l.b16 %v66
  %v286 = vunpack.c.h.b16 %v66
  %v287 = vunpack.c.l.b16 %v67
  %v288 = vunpack.c.h.b16 %v67
  %v289 = vunpack.c.l.b16 %v68
  %v290 = vunpack.c.h.b16 %v68
  %v291 = vunpack.c.l.b16 %v69
  %v292 = vunpack.c.h.b16 %v69
  %v293 = vunpack.c.l.b16 %v70
  %v294 = vunpack.c.h.b16 %v70
  %v295 = vunpack.c.l.b16 %v71
  %v296 = vunpack.c.h.b16 %v71
  %v297 = vunpack.c.l.b16 %v72
  %v298 = vunpack.c.h.b16 %v72
  %v299 = vunpack.c.l.b16 %v73
  %v300 = vunpack.c.h.b16 %v73
  %v301 = vunpack.c.l.b16 %v74
  %v302 = vunpack.c.h.b16 %v74
  %v303 = vunpack.c.l.b16 %v75
  %v304 = vunpack.c.h.b16 %v75
  %v305 = vunpack.c.l.b16 %v76
  %v306 = vunpack.c.h.b16 %v76
  %v307 = vunpack.c.l.b16 %v77
  %v308 = vunpack.c.h.b16 %v77
  %v309 = vunpack.c.l.b16 %v78
  %v310 = vunpack.c.h.b16 %v78
  %v311 = vunpack.c.l.b16 %v79
  %v312 = vunpack.c.h.b16 %v79
  %v313 = vunpack.c.l.b16 %v80
  %v314 = vunpack.c.h.b16 %v80
  %v315 = vunpack.c.l.b16 %v81
  %v316 = vunpack.c.h.b16 %v81
  %v317 = vunpack.c.l.b16 %v82
  %v318 = vunpack.c.h.b16 %v82
  %v319 = vunpack.c.l.b16 %v83
  %v320 = vunpack.c.h.b16 %v83
  %v321 = vunpack.c.l.b16 %v84
  %v322 = vunpack.c.h.b16 %v84
  %v323 = vunpack.c.l.b16 %v85
  %v324 = vunpack.c.h.b16 %v85
  %v325 = vunpack.c.l.b16 %v86
  %v326 = vunpack.c.h.b16 %v86
  %v327 = vunpack.c.l.b16 %v87
  %v328 = vunpack.c.h.b16 %v87
  %v329 = vunpack.c.l.b16 %v88
  %v330 = vunpack.c.h.b16 %v88
  %v331 = vunpack.c.l.b16 %v89
  %v332 = vunpack.c.h.b16 %v89
  %v333 = vunpack.c.l.b16 %v90
  %v334 = vunpack.c.h.b16 %v90
  %v335 = vunpack.c.l.b16 %v91
  %v336 = vunpack.c.h.b16 %v91
  %v337 = vunpack.c.l.b16 %v92
  %v338 = vunpack.c.h.b16 %v92
  %v339 = vunpack.c.l.b16 %v93
  %v340 = vunpack.c.h.b16 %v93
  %v341 = vunpack.c.l.b16 %v94
  %v342 = vunpack.c.h.b16 %v94
  %v343 = vunpack.c.l.b16 %v95
  %v344 = vunpack.c.h.b16 %v95
  %v345 = vunpack.c.l.b16 %v96
  %v346 = vunpack.c.h.b16 %v96
  %v347 = vunpack.c.l.b16 %v97
  %v348 = vunpack.c.h.b16 %v97
  %v349 = vunpack.c.l.b16 %v98
  %v350 = vunpack.c.h.b16 %v98
  %v351 = vunpack.c.l.b16 %v99
  %v352 = vunpack.c.h.b16 %v99
  %v353 = vunpack.c.l.b16 %v100
  %v354 = vunpack.c.h.b16 %v100
  %v355 = vunpack.c.l.b16 %v101
  %v356 = vunpack.c.h.b16 %v101
  %v357 = vunpack.c.l.b16 %v102
  %v358 = vunpack.c.h.b16 %v102
  %v359 = vunpack.c.l.b16 %v103
  %v360 = vunpack.c.h.b16 %v103
  %v361 = vunpack.c.l.b16 %v104
  %v362 = vunpack.c.h.b16 %v104
  %v363 = vpack.c.b16 %v215, %v211
  %v364 = vpack.c.b16 %v216, %v212
  %v365 = vpack.c.b16 %v217, %v213
  %v366 = vpack.c.b16 %v218, %v214
  %v367 = vpack.c.b16 %v223, %v219
  %v368 = vpack.c.b16 %v224, %v220
  %v369 = vpack.c.b16 %v225, %v221
  %v370 = vpack.c.b16 %v226, %v222
  %v371 = vpack.c.b16 %v231, %v227
  %v372 = vpack.c.b16 %v232, %v228
  %v373 = vpack.c.b16 %v233, %v229
  %v374 = vpack.c.b16 %v234, %v230
  %v375 = vpack.c.b16 %v239, %v235
  %v376 = vpack.c.b16 %v240, %v236
  %v377 = vpack.c.b16 %v241, %v237
  %v378 = vpack.c.b16 %v242, %v238
  %v379 = vpack.c.b16 %v247, %v243
  %v380 = vpack.c.b16 %v248, %v244
  %v381 = vpack.c.b16 %v249, %v245
  %v382 = vpack.c.b16 %v250, %v246
  %v383 = vpack.c.b16 %v255, %v251
  %v384 = vpack.c.b16 %v256, %v252
  %v385 = vpack.c.b16 %v257, %v253
  %v386 = vpack.c.b16 %v258, %v254
  %v387 = vpack.c.b16 %v263, %v259
  %v388 = vpack.c.b16 %v264, %v260
  %v389 = vpack.c.b16 %v265, %v261
  %v390 = vpack.c.b16 %v266, %v262
  %v391 = vpack.c.b16 %v271, %v267
  %v392 = vpack.c.b16 %v272, %v268
  %v393 = vpack.c.b16 %v273, %v269
  %v394 = vpack.c.b16 %v274, %v270
  %v395 = vpack.c.b16 %v279, %v275
  %v396 = vpack.c.b16 %v280, %v276
  %v397 = vpack.c.b16 %v281, %v277
  %v398 = vpack.c.b16 %v282, %v278
  %v399 = vpack.c.b16 %v287, %v283
  %v400 = vpack.c.b16 %v288, %v284
  %v401 = vpack.c.b16 %v289, %v285
  %v402 = vpack.c.b16 %v290, %v286
  %v403 = vpack.c.b16 %v295, %v291
  %v404 = vpack.c.b16 %v296, %v292
  %v405 = vpack.c.b16 %v297, %v293
  %v406 = vpack.c.b16 %v298, %v294
  %v407 = vpack.c.b16 %v303, %v299
  %v408 = vpack.c.b16 %v304, %v300
  %v409 = vpack.c.b16 %v305, %v301
  %v410 = vpack.c.b16 %v306, %v302
  %v411 = vpack.c.b16 %v311, %v307
  %v412 = vpack.c.b16 %v312, %v308
  %v413 = vpack.c.b16 %v313, %v309
  %v414 = vpack.c.b16 %v314, %v310
  %v415 = vpack.c.b16 %v319, %v315
  %v416 = vpack.c.b16 %v320, %v316
  %v417 = vpack.c.b16 %v321, %v317
  %v418 = vpack.c.b16 %v322, %v318
  %v419 = vpack.c.b16 %v327, %v323
  %v420 = vpack.c.b16 %v328, %v324
  %v421 = vpack.c.b16 %v329, %v325
  %v422 = vpack.c.b16 %v330, %v326
  %v423 = vpack.c.b16 %v335, %v331
  %v424 = vpack.c.b16 %v336, %v332
  %v425 = vpack.c.b16 %v337, %v333
  %v426 = vpack.c.b16 %v338, %v334
  %v427 = vpack.c.b16 %v343, %v339
  %v428 = vpack.c.b16 %v344, %v340
  %v429 = vpack.c.b16 %v345, %v341
  %v430 = vpack.c.b16 %v346, %v342
  %v431 = vpack.c.b16 %v351, %v347
  %v432 = vpack.c.b16 %v352, %v348
  %v433 = vpack.c.b16 %v353, %v349
  %v434 = vpack.c.b16 %v354, %v350
  %v435 = vpack.c.b16 %v359, %v355
  %v436 = vpack.c.b16 %v360, %v356
  %v437 = vpack.c.b16 %v361, %v357
  %v438 = vpack.c.b16 %v362, %v358
  %vm511 = vcmask 359424
  %v513 = vsel %vm511, %v127, 0
  %v516 = vsel %vm511, %v130, 0
  %vm518 = vcmask 1045504
  %v520 = vsel %vm518, %v435, 0
  %v523 = vsel %vm518, %v436, 0
  %v526 = vsel %vm518, %v437, 0
  %v529 = vsel %vm518, %v438, 0
  %531 = vmatpush.bf16.msra.mxu0 %v391
  %532 = vmatpush.bf16.msra.mxu0 %v387
  %533 = vmatpush.bf16.msra.mxu0 %v383
  %534 = vmatpush.bf16.msra.mxu0 %v379
  %535 = vmatpush.bf16.msra.mxu0 %v375
  %536 = vmatpush.bf16.msra.mxu0 %v371
  %537 = vmatpush.bf16.msra.mxu0 %v367
  %538 = vmatpush.bf16.msra.mxu0 %v363
  %539 = vmatmul.bf16.gmra.mxu0 %v125
  %v540 = vpop.f32.mrf.mxu0
  %v541 = vadd.f32 0.0, %v540
  %v542 = vpop.f32.mrf.mxu0
  %v543 = vadd.f32 0.0, %v542
  %544 = vmatmul.bf16.gmra.mxu0 %v128
  %v545 = vpop.f32.mrf.mxu0
  %v546 = vadd.f32 0.0, %v545
  %v547 = vpop.f32.mrf.mxu0
  %v548 = vadd.f32 0.0, %v547
  %549 = vdwg.mxu0
  %550 = vmatpush.bf16.msra.mxu0 %v423
  %551 = vmatpush.bf16.msra.mxu0 %v419
  %552 = vmatpush.bf16.msra.mxu0 %v415
  %553 = vmatpush.bf16.msra.mxu0 %v411
  %554 = vmatpush.bf16.msra.mxu0 %v407
  %555 = vmatpush.bf16.msra.mxu0 %v403
  %556 = vmatpush.bf16.msra.mxu0 %v399
  %557 = vmatpush.bf16.msra.mxu0 %v395
  %558 = vmatmul.bf16.gmra.mxu0 %v126
  %v559 = vpop.f32.mrf.mxu0
  %v560 = vadd.f32 %v541, %v559
  %v561 = vpop.f32.mrf.mxu0
  %v562 = vadd.f32 %v543, %v561
  %563 = vmatmul.bf16.gmra.mxu0 %v129
  %v564 = vpop.f32.mrf.mxu0
  %v565 = vadd.f32 %v546, %v564
  %v566 = vpop.f32.mrf.mxu0
  %v567 = vadd.f32 %v548, %v566
  %568 = vdwg.mxu0
  %569 = vmatpush.bf16.msra.mxu0 0
  %570 = vmatpush.bf16.msra.mxu0 0
  %571 = vmatpush.bf16.msra.mxu0 0
  %572 = vmatpush.bf16.msra.mxu0 0
  %573 = vmatpush.bf16.msra.mxu0 0
  %574 = vmatpush.bf16.msra.mxu0 %v520
  %575 = vmatpush.bf16.msra.mxu0 %v431
  %576 = vmatpush.bf16.msra.mxu0 %v427
  %577 = vmatmul.bf16.gmra.mxu0 %v513
  %v578 = vpop.f32.mrf.mxu0
  %v579 = vadd.f32 %v560, %v578
  %v580 = vpop.f32.mrf.mxu0
  %v581 = vadd.f32 %v562, %v580
  %582 = vmatmul.bf16.gmra.mxu0 %v516
  %v583 = vpop.f32.mrf.mxu0
  %v584 = vadd.f32 %v565, %v583
  %v585 = vpop.f32.mrf.mxu0
  %v586 = vadd.f32 %v567, %v585
  %587 = vdwg.mxu0
  %588 = vmatpush.bf16.msra.mxu0 %v392
  %589 = vmatpush.bf16.msra.mxu0 %v388
  %590 = vmatpush.bf16.msra.mxu0 %v384
  %591 = vmatpush.bf16.msra.mxu0 %v380
  %592 = vmatpush.bf16.msra.mxu0 %v376
  %593 = vmatpush.bf16.msra.mxu0 %v372
  %594 = vmatpush.bf16.msra.mxu0 %v368
  %595 = vmatpush.bf16.msra.mxu0 %v364
  %596 = vmatmul.bf16.gmra.mxu0 %v125
  %v597 = vpop.f32.mrf.mxu0
  %v598 = vadd.f32 0.0, %v597
  %v599 = vpop.f32.mrf.mxu0
  %v600 = vadd.f32 0.0, %v599
  %601 = vmatmul.bf16.gmra.mxu0 %v128
  %v602 = vpop.f32.mrf.mxu0
  %v603 = vadd.f32 0.0, %v602
  %v604 = vpop.f32.mrf.mxu0
  %v605 = vadd.f32 0.0, %v604
  %606 = vdwg.mxu0
  %607 = vmatpush.bf16.msra.mxu0 %v424
  %608 = vmatpush.bf16.msra.mxu0 %v420
  %609 = vmatpush.bf16.msra.mxu0 %v416
  %610 = vmatpush.bf16.msra.mxu0 %v412
  %611 = vmatpush.bf16.msra.mxu0 %v408
  %612 = vmatpush.bf16.msra.mxu0 %v404
  %613 = vmatpush.bf16.msra.mxu0 %v400
  %614 = vmatpush.bf16.msra.mxu0 %v396
  %615 = vmatmul.bf16.gmra.mxu0 %v126
  %v616 = vpop.f32.mrf.mxu0
  %v617 = vadd.f32 %v598, %v616
  %v618 = vpop.f32.mrf.mxu0
  %v619 = vadd.f32 %v600, %v618
  %620 = vmatmul.bf16.gmra.mxu0 %v129
  %v621 = vpop.f32.mrf.mxu0
  %v622 = vadd.f32 %v603, %v621
  %v623 = vpop.f32.mrf.mxu0
  %v624 = vadd.f32 %v605, %v623
  %625 = vdwg.mxu0
  %626 = vmatpush.bf16.msra.mxu0 0
  %627 = vmatpush.bf16.msra.mxu0 0
  %628 = vmatpush.bf16.msra.mxu0 0
  %629 = vmatpush.bf16.msra.mxu0 0
  %630 = vmatpush.bf16.msra.mxu0 0
  %631 = vmatpush.bf16.msra.mxu0 %v523
  %632 = vmatpush.bf16.msra.mxu0 %v432
  %633 = vmatpush.bf16.msra.mxu0 %v428
  %634 = vmatmul.bf16.gmra.mxu0 %v513
  %v635 = vpop.f32.mrf.mxu0
  %v636 = vadd.f32 %v617, %v635
  %v637 = vpop.f32.mrf.mxu0
  %v638 = vadd.f32 %v619, %v637
  %639 = vmatmul.bf16.gmra.mxu0 %v516
  %v640 = vpop.f32.mrf.mxu0
  %v641 = vadd.f32 %v622, %v640
  %v642 = vpop.f32.mrf.mxu0
  %v643 = vadd.f32 %v624, %v642
  %644 = vdwg.mxu0
  %645 = vmatpush.bf16.msra.mxu0 %v393
  %646 = vmatpush.bf16.msra.mxu0 %v389
  %647 = vmatpush.bf16.msra.mxu0 %v385
  %648 = vmatpush.bf16.msra.mxu0 %v381
  %649 = vmatpush.bf16.msra.mxu0 %v377
  %650 = vmatpush.bf16.msra.mxu0 %v373
  %651 = vmatpush.bf16.msra.mxu0 %v369
  %652 = vmatpush.bf16.msra.mxu0 %v365
  %653 = vmatmul.bf16.gmra.mxu0 %v125
  %v654 = vpop.f32.mrf.mxu0
  %v655 = vadd.f32 0.0, %v654
  %v656 = vpop.f32.mrf.mxu0
  %v657 = vadd.f32 0.0, %v656
  %658 = vmatmul.bf16.gmra.mxu0 %v128
  %v659 = vpop.f32.mrf.mxu0
  %v660 = vadd.f32 0.0, %v659
  %v661 = vpop.f32.mrf.mxu0
  %v662 = vadd.f32 0.0, %v661
  %663 = vdwg.mxu0
  %664 = vmatpush.bf16.msra.mxu0 %v425
  %665 = vmatpush.bf16.msra.mxu0 %v421
  %666 = vmatpush.bf16.msra.mxu0 %v417
  %667 = vmatpush.bf16.msra.mxu0 %v413
  %668 = vmatpush.bf16.msra.mxu0 %v409
  %669 = vmatpush.bf16.msra.mxu0 %v405
  %670 = vmatpush.bf16.msra.mxu0 %v401
  %671 = vmatpush.bf16.msra.mxu0 %v397
  %672 = vmatmul.bf16.gmra.mxu0 %v126
  %v673 = vpop.f32.mrf.mxu0
  %v674 = vadd.f32 %v655, %v673
  %v675 = vpop.f32.mrf.mxu0
  %v676 = vadd.f32 %v657, %v675
  %677 = vmatmul.bf16.gmra.mxu0 %v129
  %v678 = vpop.f32.mrf.mxu0
  %v679 = vadd.f32 %v660, %v678
  %v680 = vpop.f32.mrf.mxu0
  %v681 = vadd.f32 %v662, %v680
  %682 = vdwg.mxu0
  %683 = vmatpush.bf16.msra.mxu0 0
  %684 = vmatpush.bf16.msra.mxu0 0
  %685 = vmatpush.bf16.msra.mxu0 0
  %686 = vmatpush.bf16.msra.mxu0 0
  %687 = vmatpush.bf16.msra.mxu0 0
  %688 = vmatpush.bf16.msra.mxu0 %v526
  %689 = vmatpush.bf16.msra.mxu0 %v433
  %690 = vmatpush.bf16.msra.mxu0 %v429
  %691 = vmatmul.bf16.gmra.mxu0 %v513
  %v692 = vpop.f32.mrf.mxu0
  %v693 = vadd.f32 %v674, %v692
  %v694 = vpop.f32.mrf.mxu0
  %v695 = vadd.f32 %v676, %v694
  %696 = vmatmul.bf16.gmra.mxu0 %v516
  %v697 = vpop.f32.mrf.mxu0
  %v698 = vadd.f32 %v679, %v697
  %v699 = vpop.f32.mrf.mxu0
  %v700 = vadd.f32 %v681, %v699
  %701 = vdwg.mxu0
  %702 = vmatpush.bf16.msra.mxu0 %v394
  %703 = vmatpush.bf16.msra.mxu0 %v390
  %704 = vmatpush.bf16.msra.mxu0 %v386
  %705 = vmatpush.bf16.msra.mxu0 %v382
  %706 = vmatpush.bf16.msra.mxu0 %v378
  %707 = vmatpush.bf16.msra.mxu0 %v374
  %708 = vmatpush.bf16.msra.mxu0 %v370
  %709 = vmatpush.bf16.msra.mxu0 %v366
  %710 = vmatmul.bf16.gmra.mxu0 %v125
  %v711 = vpop.f32.mrf.mxu0
  %v712 = vadd.f32 0.0, %v711
  %v713 = vpop.f32.mrf.mxu0
  %v714 = vadd.f32 0.0, %v713
  %715 = vmatmul.bf16.gmra.mxu0 %v128
  %v716 = vpop.f32.mrf.mxu0
  %v717 = vadd.f32 0.0, %v716
  %v718 = vpop.f32.mrf.mxu0
  %v719 = vadd.f32 0.0, %v718
  %720 = vdwg.mxu0
  %721 = vmatpush.bf16.msra.mxu0 %v426
  %722 = vmatpush.bf16.msra.mxu0 %v422
  %723 = vmatpush.bf16.msra.mxu0 %v418
  %724 = vmatpush.bf16.msra.mxu0 %v414
  %725 = vmatpush.bf16.msra.mxu0 %v410
  %726 = vmatpush.bf16.msra.mxu0 %v406
  %727 = vmatpush.bf16.msra.mxu0 %v402
  %728 = vmatpush.bf16.msra.mxu0 %v398
  %729 = vmatmul.bf16.gmra.mxu0 %v126
  %v730 = vpop.f32.mrf.mxu0
  %v731 = vadd.f32 %v712, %v730
  %v732 = vpop.f32.mrf.mxu0
  %v733 = vadd.f32 %v714, %v732
  %734 = vmatmul.bf16.gmra.mxu0 %v129
  %v735 = vpop.f32.mrf.mxu0
  %v736 = vadd.f32 %v717, %v735
  %v737 = vpop.f32.mrf.mxu0
  %v738 = vadd.f32 %v719, %v737
  %739 = vdwg.mxu0
  %740 = vmatpush.bf16.msra.mxu0 0
  %741 = vmatpush.bf16.msra.mxu0 0
  %742 = vmatpush.bf16.msra.mxu0 0
  %743 = vmatpush.bf16.msra.mxu0 0
  %744 = vmatpush.bf16.msra.mxu0 0
  %745 = vmatpush.bf16.msra.mxu0 %v529
  %746 = vmatpush.bf16.msra.mxu0 %v434
  %747 = vmatpush.bf16.msra.mxu0 %v430
  %748 = vmatmul.bf16.gmra.mxu0 %v513
  %v749 = vpop.f32.mrf.mxu0
  %v750 = vadd.f32 %v731, %v749
  %v751 = vpop.f32.mrf.mxu0
  %v752 = vadd.f32 %v733, %v751
  %753 = vmatmul.bf16.gmra.mxu0 %v516
  %v754 = vpop.f32.mrf.mxu0
  %v755 = vadd.f32 %v736, %v754
  %v756 = vpop.f32.mrf.mxu0
  %v757 = vadd.f32 %v738, %v756
  %758 = vdwg.mxu0
  %v759 = vmax.f32 %v579, %v581
  %v760 = vmax.f32 %v636, %v638
  %v761 = vmax.f32 %v693, %v695
  %v762 = vmax.f32 %v750, %v752
  %v763 = vmax.f32 %v584, %v586
  %v764 = vmax.f32 %v641, %v643
  %v765 = vmax.f32 %v698, %v700
  %v766 = vmax.f32 %v755, %v757
  %v767 = vmax.f32 %v759, %v763
  %v768 = vmax.f32 %v760, %v764
  %v769 = vmax.f32 %v761, %v765
  %v770 = vmax.f32 %v762, %v766
  %v771 = vld [vmem:[%s1] sm:$0xff]
  %773 = vset.pattern.permute.xlu0 0
  %774 = vperm.xlu0 %773, %v771
  %v775 = vpop.permute.xlu0 %774
  %v777 = vadd.f32 %v767, %v775
  %v778 = vadd.f32 %v768, %v775
  %v779 = vadd.f32 %v769, %v775
  %v780 = vadd.f32 %v770, %v775
  %v781 = vmax.f32 %v777, 0.0
  %v782 = vmax.f32 %v778, 0.0
  %v783 = vmax.f32 %v779, 0.0
  %v784 = vmax.f32 %v780, 0.0
  %v785 = vld [vmem:[%s2] sm:$0xff]
  %787 = vset.pattern.permute.xlu0 0
  %788 = vperm.xlu0 %787, %v785
  %v789 = vpop.permute.xlu0 %788
  %v791 = vmul.f32 %v781, %v789
  %v792 = vmul.f32 %v782, %v789
  %v793 = vmul.f32 %v783, %v789
  %v794 = vmul.f32 %v784, %v789
  %v795 = vld [vmem:[%s3] sm:$0xff]
  %797 = vset.pattern.permute.xlu0 0
  %798 = vperm.xlu0 %797, %v795
  %v799 = vpop.permute.xlu0 %798
  %v801 = vadd.f32 %v791, %v799
  %v802 = vadd.f32 %v792, %v799
  %v803 = vadd.f32 %v793, %v799
  %v804 = vadd.f32 %v794, %v799
  %805 = vst [vmem:[%s5] sm:$0xff] %v801
  %806 = vst [vmem:[%s5 + $0x8] sm:$0xff] %v802
  %807 = vst [vmem:[%s5 + $0x10] sm:$0xff] %v803
  %808 = vst [vmem:[%s5 + $0x18] sm:$0xff] %v804
  // Predicated region
  $region22: #{lenet_forward.3} parent=0 // pred_check
    _
  $region23: #{lenet_forward.3} parent=0 // pred_check_branch
    %810 = sbr.rel (0) target = $region25
  $region24: #{lenet_forward.3} parent=0 // pred_region
    _
  $region25: #{lenet_forward.3} parent=0 // pred_fallthru
    _
  // Predicated region
  $region26: #{lenet_forward.3} parent=0 // pred_check
    _
  $region27: #{lenet_forward.3} parent=0 // pred_check_branch
    %812 = sbr.rel (0) target = $region29
  $region28: #{lenet_forward.3} parent=0 // pred_region
    _
  $region29: #{lenet_forward.3} parent=0 // pred_fallthru
    _

// kernel: lenet_forward.5
$region0: #{lenet_forward.5}
  #allocation0 [shape = 'u32[]', space=smem, size = 0x4, offset = 0x4, fixed_abs, tag = 'smem constant byte address 0x4 - core index']
  #allocation1 [shape = 'u32[72,128]{1,0:T(1,128)}', space=vmem, size = 0x9000, scoped, tag = 'internal scratch']
  %s0 = inlined_call_operand.vmem [shape: bf16[2,400], index: 0, kind: input, shape index: {}]
  %s1 = inlined_call_operand.vmem [shape: bf16[400,128], index: 1, kind: input, shape index: {}]
  %s2 = inlined_call_operand.vmem [shape: f32[1,128], index: 2, kind: input, shape index: {}]
  %s3 = inlined_call_operand.vmem [shape: bf16[128,128], index: 3, kind: input, shape index: {}]
  %s4 = inlined_call_operand.vmem [shape: f32[1,128], index: 4, kind: input, shape index: {}]
  %s5 = inlined_call_operand.vmem [shape: bf16[128,128], index: 5, kind: input, shape index: {}]
  %s6 = inlined_call_operand.vmem [shape: f32[1,128], index: 6, kind: input, shape index: {}]
  %s7 = inlined_call_operand.hbm [shape: f32[2,128], index: 7, kind: output, shape index: {}]
  %s8 = sld [smem:[#allocation0]]
  $region38: #{lenet_forward.5} parent=0
    _
  %s10 = ssub.s32 1, %s8
  %s11 = scalar_select 0, %s10, %s8
  $region1: #{lenet_forward.5} parent=0
    #allocation2 [shape = 'u8[1024]{0}', space=vmem, size = 0x400, scoped, tag = 'output window, operand 0, single buffered']
    #allocation3 [shape = 's32[1]{0}', space=sflag, size = 0x4, scoped, tag = 'scoped memory for lenet_forward.5']
    %12 = vsyncpa [#allocation3], 0
    // Predicated region
    $region2: #{lenet_forward.5} parent=1 // pred_check
      _
    $region3: #{lenet_forward.5} parent=1 // pred_check_branch
      %14 = sbr.rel (0) target = $region5
    $region4: #{lenet_forward.5} parent=1 // pred_region
      _
    $region5: #{lenet_forward.5} parent=1 // pred_fallthru
      _
    // Predicated region
    $region6: #{lenet_forward.5} parent=1 // pred_check
      _
    $region7: #{lenet_forward.5} parent=1 // pred_check_branch
      %16 = sbr.rel (0) target = $region9
    $region8: #{lenet_forward.5} parent=1 // pred_region
      _
    $region9: #{lenet_forward.5} parent=1 // pred_fallthru
      _
    // Predicated region
    $region10: #{lenet_forward.5} parent=1 // pred_check
      _
    $region11: #{lenet_forward.5} parent=1 // pred_check_branch
      %18 = sbr.rel (0) target = $region13
    $region12: #{lenet_forward.5} parent=1 // pred_region
      _
    $region13: #{lenet_forward.5} parent=1 // pred_fallthru
      _
    // Predicated region
    $region14: #{lenet_forward.5} parent=1 // pred_check
      _
    $region15: #{lenet_forward.5} parent=1 // pred_check_branch
      %20 = sbr.rel (0) target = $region17
    $region16: #{lenet_forward.5} parent=1 // pred_region
      _
    $region17: #{lenet_forward.5} parent=1 // pred_fallthru
      _
    // Predicated region
    $region18: #{lenet_forward.5} parent=1 // pred_check
      _
    $region19: #{lenet_forward.5} parent=1 // pred_check_branch
      %22 = sbr.rel (0) target = $region21
    $region20: #{lenet_forward.5} parent=1 // pred_region
      _
    $region21: #{lenet_forward.5} parent=1 // pred_fallthru
      _
    // Predicated region
    $region22: #{lenet_forward.5} parent=1 // pred_check
      _
    $region23: #{lenet_forward.5} parent=1 // pred_check_branch
      %24 = sbr.rel (0) target = $region25
    $region24: #{lenet_forward.5} parent=1 // pred_region
      _
    $region25: #{lenet_forward.5} parent=1 // pred_fallthru
      _
    // Predicated region
    $region26: #{lenet_forward.5} parent=1 // pred_check
      _
    $region27: #{lenet_forward.5} parent=1 // pred_check_branch
      %26 = sbr.rel (0) target = $region29
    $region28: #{lenet_forward.5} parent=1 // pred_region
      _
    $region29: #{lenet_forward.5} parent=1 // pred_fallthru
      _
    %v28 = vld [vmem:[%s0] sm:$0xf]
    %v29 = vld [vmem:[%s1] sm:$0xf]
    %v30 = vld [vmem:[%s1 + $0x4] sm:$0xf]
    %v31 = vld [vmem:[%s1 + $0x8] sm:$0xf]
    %v32 = vld [vmem:[%s1 + $0xc] sm:$0xf]
    %v33 = vld [vmem:[%s1 + $0x10] sm:$0xf]
    %v34 = vld [vmem:[%s1 + $0x14] sm:$0xf]
    %v35 = vld [vmem:[%s1 + $0x18] sm:$0xf]
    %v36 = vld [vmem:[%s1 + $0x1c] sm:$0xf]
    %v37 = vld [vmem:[%s1 + $0x20] sm:$0xf]
    %v38 = vld [vmem:[%s1 + $0x24] sm:$0xf]
    %v39 = vld [vmem:[%s1 + $0x28] sm:$0xf]
    %v40 = vld [vmem:[%s1 + $0x2c] sm:$0xf]
    %v41 = vld [vmem:[%s1 + $0x30] sm:$0xf]
    %v42 = vld [vmem:[%s1 + $0x34] sm:$0xf]
    %v43 = vld [vmem:[%s1 + $0x38] sm:$0xf]
    %v44 = vld [vmem:[%s1 + $0x3c] sm:$0xf]
    %v45 = vld [vmem:[%s1 + $0x40] sm:$0xf]
    %v46 = vld [vmem:[%s1 + $0x44] sm:$0xf]
    %v47 = vld [vmem:[%s1 + $0x48] sm:$0xf]
    %v48 = vld [vmem:[%s1 + $0x4c] sm:$0xf]
    %v49 = vld [vmem:[%s1 + $0x50] sm:$0xf]
    %v50 = vld [vmem:[%s1 + $0x54] sm:$0xf]
    %v51 = vld [vmem:[%s1 + $0x58] sm:$0xf]
    %v52 = vld [vmem:[%s1 + $0x5c] sm:$0xf]
    %v53 = vld [vmem:[%s1 + $0x60] sm:$0xf]
    %v54 = vld [vmem:[%s1 + $0x64] sm:$0xf]
    %v55 = vld [vmem:[%s1 + $0x68] sm:$0xf]
    %v56 = vld [vmem:[%s1 + $0x6c] sm:$0xf]
    %v57 = vld [vmem:[%s1 + $0x70] sm:$0xf]
    %v58 = vld [vmem:[%s1 + $0x74] sm:$0xf]
    %v59 = vld [vmem:[%s1 + $0x78] sm:$0xf]
    %v60 = vld [vmem:[%s1 + $0x7c] sm:$0xf]
    %v61 = vld [vmem:[%s1 + $0x80] sm:$0xf]
    %v62 = vld [vmem:[%s1 + $0x84] sm:$0xf]
    %v63 = vld [vmem:[%s1 + $0x88] sm:$0xf]
    %v64 = vld [vmem:[%s1 + $0x8c] sm:$0xf]
    %v65 = vld [vmem:[%s1 + $0x90] sm:$0xf]
    %v66 = vld [vmem:[%s1 + $0x94] sm:$0xf]
    %v67 = vld [vmem:[%s1 + $0x98] sm:$0xf]
    %v68 = vld [vmem:[%s1 + $0x9c] sm:$0xf]
    %v69 = vld [vmem:[%s1 + $0xa0] sm:$0xf]
    %v70 = vld [vmem:[%s1 + $0xa4] sm:$0xf]
    %v71 = vld [vmem:[%s1 + $0xa8] sm:$0xf]
    %v72 = vld [vmem:[%s1 + $0xac] sm:$0xf]
    %v73 = vld [vmem:[%s1 + $0xb0] sm:$0xf]
    %v74 = vld [vmem:[%s1 + $0xb4] sm:$0xf]
    %v75 = vld [vmem:[%s1 + $0xb8] sm:$0xf]
    %v76 = vld [vmem:[%s1 + $0xbc] sm:$0xf]
    %v77 = vld [vmem:[%s1 + $0xc0] sm:$0xf]
    %v78 = vld [vmem:[%s1 + $0xc4] sm:$0xf]
    %v79 = vld [vmem:[%s2] sm:$0x1]
    %v81 = vperm.slane %v79, 0
    %84 = vst [vmem:[#allocation1] ss:$9 sm:$0xff] %v28
    %v85 = vld [vmem:[#allocation1] sm:$0xff]
    %v86 = vld [vmem:[#allocation1 + $0x9] sm:$0xff]
    %v87 = vld [vmem:[#allocation1 + $0x12] sm:$0xff]
    %v88 = vld [vmem:[#allocation1 + $0x1b] sm:$0xff]
    %v142 = vunpack.c.l.b16 %v29
    %v143 = vunpack.c.l.b16 %v30
    %v144 = vunpack.c.l.b16 %v31
    %v145 = vunpack.c.l.b16 %v32
    %v146 = vunpack.c.l.b16 %v33
    %v147 = vunpack.c.l.b16 %v34
    %v148 = vunpack.c.l.b16 %v35
    %v149 = vunpack.c.l.b16 %v36
    %v150 = vunpack.c.l.b16 %v37
    %v151 = vunpack.c.l.b16 %v38
    %v152 = vunpack.c.l.b16 %v39
    %v153 = vunpack.c.l.b16 %v40
    %v154 = vunpack.c.l.b16 %v41
    %v155 = vunpack.c.l.b16 %v42
    %v156 = vunpack.c.l.b16 %v43
    %v157 = vunpack.c.l.b16 %v44
    %v158 = vunpack.c.l.b16 %v45
    %v159 = vunpack.c.l.b16 %v46
    %v160 = vunpack.c.l.b16 %v47
    %v161 = vunpack.c.l.b16 %v48
    %v162 = vunpack.c.l.b16 %v49
    %v163 = vunpack.c.l.b16 %v50
    %v164 = vunpack.c.l.b16 %v51
    %v165 = vunpack.c.l.b16 %v52
    %v166 = vunpack.c.l.b16 %v53
    %v167 = vunpack.c.l.b16 %v54
    %v168 = vunpack.c.l.b16 %v55
    %v169 = vunpack.c.l.b16 %v56
    %v170 = vunpack.c.l.b16 %v57
    %v171 = vunpack.c.l.b16 %v58
    %v172 = vunpack.c.l.b16 %v59
    %v173 = vunpack.c.l.b16 %v60
    %v174 = vunpack.c.l.b16 %v61
    %v175 = vunpack.c.l.b16 %v62
    %v176 = vunpack.c.l.b16 %v63
    %v177 = vunpack.c.l.b16 %v64
    %v178 = vunpack.c.l.b16 %v65
    %v179 = vunpack.c.l.b16 %v66
    %v180 = vunpack.c.l.b16 %v67
    %v181 = vunpack.c.l.b16 %v68
    %v182 = vunpack.c.l.b16 %v69
    %v183 = vunpack.c.l.b16 %v70
    %v184 = vunpack.c.l.b16 %v71
    %v185 = vunpack.c.l.b16 %v72
    %v186 = vunpack.c.l.b16 %v73
    %v187 = vunpack.c.l.b16 %v74
    %v188 = vunpack.c.l.b16 %v75
    %v189 = vunpack.c.l.b16 %v76
    %v190 = vunpack.c.l.b16 %v77
    %v191 = vunpack.c.l.b16 %v78
    %v192 = vpack.c.b16 %v143, %v142
    %v193 = vpack.c.b16 %v145, %v144
    %v194 = vpack.c.b16 %v147, %v146
    %v195 = vpack.c.b16 %v149, %v148
    %v196 = vpack.c.b16 %v151, %v150
    %v197 = vpack.c.b16 %v153, %v152
    %v198 = vpack.c.b16 %v155, %v154
    %v199 = vpack.c.b16 %v157, %v156
    %v200 = vpack.c.b16 %v159, %v158
    %v201 = vpack.c.b16 %v161, %v160
    %v202 = vpack.c.b16 %v163, %v162
    %v203 = vpack.c.b16 %v165, %v164
    %v204 = vpack.c.b16 %v167, %v166
    %v205 = vpack.c.b16 %v169, %v168
    %v206 = vpack.c.b16 %v171, %v170
    %v207 = vpack.c.b16 %v173, %v172
    %v208 = vpack.c.b16 %v175, %v174
    %v209 = vpack.c.b16 %v177, %v176
    %v210 = vpack.c.b16 %v179, %v178
    %v211 = vpack.c.b16 %v181, %v180
    %v212 = vpack.c.b16 %v183, %v182
    %v213 = vpack.c.b16 %v185, %v184
    %v214 = vpack.c.b16 %v187, %v186
    %v215 = vpack.c.b16 %v189, %v188
    %v216 = vpack.c.b16 %v191, %v190
    %vm242 = vcmask 130048
    %v243 = vsel %vm242, %v88, 0
    %245 = vmatpush.bf16.msra.mxu0 %v199
    %246 = vmatpush.bf16.msra.mxu0 %v198
    %247 = vmatpush.bf16.msra.mxu0 %v197
    %248 = vmatpush.bf16.msra.mxu0 %v196
    %249 = vmatpush.bf16.msra.mxu0 %v195
    %250 = vmatpush.bf16.msra.mxu0 %v194
    %251 = vmatpush.bf16.msra.mxu0 %v193
    %252 = vmatpush.bf16.msra.mxu0 %v192
    %253 = vmatmul.bf16.gmra.mxu0 %v85
    %v254 = vpop.f32.mrf.mxu0
    %v255 = vadd.f32 %v81, %v254
    %v256 = vpop.f32.mrf.mxu0
    %257 = vdwg.mxu0
    %258 = vmatpush.bf16.msra.mxu0 %v207
    %259 = vmatpush.bf16.msra.mxu0 %v206
    %260 = vmatpush.bf16.msra.mxu0 %v205
    %261 = vmatpush.bf16.msra.mxu0 %v204
    %262 = vmatpush.bf16.msra.mxu0 %v203
    %263 = vmatpush.bf16.msra.mxu0 %v202
    %264 = vmatpush.bf16.msra.mxu0 %v201
    %265 = vmatpush.bf16.msra.mxu0 %v200
    %266 = vmatmul.bf16.gmra.mxu0 %v86
    %v267 = vpop.f32.mrf.mxu0
    %v268 = vadd.f32 %v255, %v267
    %v269 = vpop.f32.mrf.mxu0
    %270 = vdwg.mxu0
    %271 = vmatpush.bf16.msra.mxu0 %v215
    %272 = vmatpush.bf16.msra.mxu0 %v214
    %273 = vmatpush.bf16.msra.mxu0 %v213
    %274 = vmatpush.bf16.msra.mxu0 %v212
    %275 = vmatpush.bf16.msra.mxu0 %v211
    %276 = vmatpush.bf16.msra.mxu0 %v210
    %277 = vmatpush.bf16.msra.mxu0 %v209
    %278 = vmatpush.bf16.msra.mxu0 %v208
    %279 = vmatmul.bf16.gmra.mxu0 %v87
    %v280 = vpop.f32.mrf.mxu0
    %v281 = vadd.f32 %v268, %v280
    %v282 = vpop.f32.mrf.mxu0
    %283 = vdwg.mxu0
    %284 = vmatpush.bf16.msra.mxu0 0
    %285 = vmatpush.bf16.msra.mxu0 0
    %286 = vmatpush.bf16.msra.mxu0 0
    %287 = vmatpush.bf16.msra.mxu0 0
    %288 = vmatpush.bf16.msra.mxu0 0
    %289 = vmatpush.bf16.msra.mxu0 0
    %290 = vmatpush.bf16.msra.mxu0 0
    %291 = vmatpush.bf16.msra.mxu0 %v216
    %292 = vmatmul.bf16.gmra.mxu0 %v243
    %v293 = vpop.f32.mrf.mxu0
    %v294 = vadd.f32 %v281, %v293
    %v295 = vpop.f32.mrf.mxu0
    %296 = vdwg.mxu0
    %v297 = vmax.f32 %v294, 0.0
    %v298 = vpack.c.bf16 %v297, %v297
    %v299 = vld [vmem:[%s3] sm:$0xf]
    %v300 = vld [vmem:[%s3 + $0x4] sm:$0xf]
    %v301 = vld [vmem:[%s3 + $0x8] sm:$0xf]
    %v302 = vld [vmem:[%s3 + $0xc] sm:$0xf]
    %v303 = vld [vmem:[%s3 + $0x10] sm:$0xf]
    %v304 = vld [vmem:[%s3 + $0x14] sm:$0xf]
    %v305 = vld [vmem:[%s3 + $0x18] sm:$0xf]
    %v306 = vld [vmem:[%s3 + $0x1c] sm:$0xf]
    %v307 = vld [vmem:[%s3 + $0x20] sm:$0xf]
    %v308 = vld [vmem:[%s3 + $0x24] sm:$0xf]
    %v309 = vld [vmem:[%s3 + $0x28] sm:$0xf]
    %v310 = vld [vmem:[%s3 + $0x2c] sm:$0xf]
    %v311 = vld [vmem:[%s3 + $0x30] sm:$0xf]
    %v312 = vld [vmem:[%s3 + $0x34] sm:$0xf]
    %v313 = vld [vmem:[%s3 + $0x38] sm:$0xf]
    %v314 = vld [vmem:[%s3 + $0x3c] sm:$0xf]
    %v315 = vld [vmem:[%s4] sm:$0x1]
    %v317 = vperm.slane %v315, 0
    %v335 = vunpack.c.l.b16 %v299
    %v336 = vunpack.c.l.b16 %v300
    %v337 = vunpack.c.l.b16 %v301
    %v338 = vunpack.c.l.b16 %v302
    %v339 = vunpack.c.l.b16 %v303
    %v340 = vunpack.c.l.b16 %v304
    %v341 = vunpack.c.l.b16 %v305
    %v342 = vunpack.c.l.b16 %v306
    %v343 = vunpack.c.l.b16 %v307
    %v344 = vunpack.c.l.b16 %v308
    %v345 = vunpack.c.l.b16 %v309
    %v346 = vunpack.c.l.b16 %v310
    %v347 = vunpack.c.l.b16 %v311
    %v348 = vunpack.c.l.b16 %v312
    %v349 = vunpack.c.l.b16 %v313
    %v350 = vunpack.c.l.b16 %v314
    %v351 = vpack.c.b16 %v336, %v335
    %v352 = vpack.c.b16 %v338, %v337
    %v353 = vpack.c.b16 %v340, %v339
    %v354 = vpack.c.b16 %v342, %v341
    %v355 = vpack.c.b16 %v344, %v343
    %v356 = vpack.c.b16 %v346, %v345
    %v357 = vpack.c.b16 %v348, %v347
    %v358 = vpack.c.b16 %v350, %v349
    %367 = vmatpush.bf16.msra.mxu0 %v358
    %368 = vmatpush.bf16.msra.mxu0 %v357
    %369 = vmatpush.bf16.msra.mxu0 %v356
    %370 = vmatpush.bf16.msra.mxu0 %v355
    %371 = vmatpush.bf16.msra.mxu0 %v354
    %372 = vmatpush.bf16.msra.mxu0 %v353
    %373 = vmatpush.bf16.msra.mxu0 %v352
    %374 = vmatpush.bf16.msra.mxu0 %v351
    %375 = vmatmul.bf16.gmra.mxu0 %v298
    %v376 = vpop.f32.mrf.mxu0
    %v377 = vadd.f32 %v317, %v376
    %v378 = vpop.f32.mrf.mxu0
    %379 = vdwg.mxu0
    %v380 = vmax.f32 %v377, 0.0
    %v381 = vpack.c.bf16 %v380, %v380
    %v382 = vld [vmem:[%s5] sm:$0xf]
    %v383 = vld [vmem:[%s5 + $0x4] sm:$0xf]
    %v384 = vld [vmem:[%s5 + $0x8] sm:$0xf]
    %v385 = vld [vmem:[%s5 + $0xc] sm:$0xf]
    %v386 = vld [vmem:[%s5 + $0x10] sm:$0xf]
    %v387 = vld [vmem:[%s5 + $0x14] sm:$0xf]
    %v388 = vld [vmem:[%s5 + $0x18] sm:$0xf]
    %v389 = vld [vmem:[%s5 + $0x1c] sm:$0xf]
    %v390 = vld [vmem:[%s5 + $0x20] sm:$0xf]
    %v391 = vld [vmem:[%s5 + $0x24] sm:$0xf]
    %v392 = vld [vmem:[%s5 + $0x28] sm:$0xf]
    %v393 = vld [vmem:[%s5 + $0x2c] sm:$0xf]
    %v394 = vld [vmem:[%s5 + $0x30] sm:$0xf]
    %v395 = vld [vmem:[%s5 + $0x34] sm:$0xf]
    %v396 = vld [vmem:[%s5 + $0x38] sm:$0xf]
    %v397 = vld [vmem:[%s5 + $0x3c] sm:$0xf]
    %v398 = vld [vmem:[%s6] sm:$0x1]
    %v400 = vperm.slane %v398, 0
    %v418 = vunpack.c.l.b16 %v382
    %v419 = vunpack.c.l.b16 %v383
    %v420 = vunpack.c.l.b16 %v384
    %v421 = vunpack.c.l.b16 %v385
    %v422 = vunpack.c.l.b16 %v386
    %v423 = vunpack.c.l.b16 %v387
    %v424 = vunpack.c.l.b16 %v388
    %v425 = vunpack.c.l.b16 %v389
    %v426 = vunpack.c.l.b16 %v390
    %v427 = vunpack.c.l.b16 %v391
    %v428 = vunpack.c.l.b16 %v392
    %v429 = vunpack.c.l.b16 %v393
    %v430 = vunpack.c.l.b16 %v394
    %v431 = vunpack.c.l.b16 %v395
    %v432 = vunpack.c.l.b16 %v396
    %v433 = vunpack.c.l.b16 %v397
    %v434 = vpack.c.b16 %v419, %v418
    %v435 = vpack.c.b16 %v421, %v420
    %v436 = vpack.c.b16 %v423, %v422
    %v437 = vpack.c.b16 %v425, %v424
    %v438 = vpack.c.b16 %v427, %v426
    %v439 = vpack.c.b16 %v429, %v428
    %v440 = vpack.c.b16 %v431, %v430
    %v441 = vpack.c.b16 %v433, %v432
    %450 = vmatpush.bf16.msra.mxu0 %v441
    %451 = vmatpush.bf16.msra.mxu0 %v440
    %452 = vmatpush.bf16.msra.mxu0 %v439
    %453 = vmatpush.bf16.msra.mxu0 %v438
    %454 = vmatpush.bf16.msra.mxu0 %v437
    %455 = vmatpush.bf16.msra.mxu0 %v436
    %456 = vmatpush.bf16.msra.mxu0 %v435
    %457 = vmatpush.bf16.msra.mxu0 %v434
    %458 = vmatmul.bf16.gmra.mxu0 %v381
    %v459 = vpop.f32.mrf.mxu0
    %v460 = vadd.f32 %v400, %v459
    %v461 = vpop.f32.mrf.mxu0
    %462 = vdwg.mxu0
    %463 = vst [vmem:[#allocation2] sm:$0x3] %v460
    // Predicated region
    $region30: #{lenet_forward.5} parent=1 // pred_check
      _
    $region31: #{lenet_forward.5} parent=1 // pred_check_branch
      %465 = sbr.rel (0) target = $region33
    $region32: #{lenet_forward.5} parent=1 // pred_region
      %467 = vsyncadd [#allocation3], 0
      %s469 = sshll.u32 [#allocation2], 4
      %s470 = int_to_ptr.vmem [resolvable:$true] %s469
      %s471 = sshll.u32 %s7, 4
      %s472 = int_to_ptr.hbm [resolvable:$true] %s471
      %474 = dma.vmem_to_hbm [thread:$0]  %s470, 32, %s472, [#allocation3]
    $region33: #{lenet_forward.5} parent=1 // pred_fallthru
      _
    // Predicated region
    $region34: #{lenet_forward.5} parent=1 // pred_check
      _
    $region35: #{lenet_forward.5} parent=1 // pred_check_branch
      %476 = sbr.rel (0) target = $region37
    $region36: #{lenet_forward.5} parent=1 // pred_region
      %478 = dma.done [#allocation3], 32
    $region37: #{lenet_forward.5} parent=1 // pred_fallthru
      _
    %479 = vsyncpa [#allocation3], 1

// kernel: lenet_forward.4
$region0: #{lenet_forward.4}
  #allocation0 [shape = 'u32[]', space=smem, size = 0x4, offset = 0x4, fixed_abs, tag = 'smem constant byte address 0x4 - core index']
  #allocation1 [shape = 'u32[72,128]{1,0:T(1,128)}', space=vmem, size = 0x9000, scoped, tag = 'internal scratch']
  %s0 = inlined_call_operand.vmem [shape: bf16[64,600], index: 0, kind: input, shape index: {}]
  %s1 = inlined_call_operand.vmem [shape: f32[16,1], index: 1, kind: input, shape index: {}]
  %s2 = inlined_call_operand.vmem [shape: f32[16,1], index: 2, kind: input, shape index: {}]
  %s3 = inlined_call_operand.vmem [shape: f32[16,1], index: 3, kind: input, shape index: {}]
  %s4 = inlined_call_operand.vmem [shape: bf16[600,128], index: 4, kind: input, shape index: {}]
  %s5 = inlined_call_operand.vmem [shape: f32[16,128], index: 5, kind: output, shape index: {}]
  %s6 = sld [smem:[#allocation0]]
  $region30: #{lenet_forward.4} parent=0
    _
  %s8 = ssub.s32 1, %s6
  %s9 = scalar_select 0, %s8, %s6
  // Predicated region
  $region2: #{lenet_forward.4} parent=0 // pred_check
    _
  $region3: #{lenet_forward.4} parent=0 // pred_check_branch
    %11 = sbr.rel (0) target = $region5
  $region4: #{lenet_forward.4} parent=0 // pred_region
    _
  $region5: #{lenet_forward.4} parent=0 // pred_fallthru
    _
  // Predicated region
  $region6: #{lenet_forward.4} parent=0 // pred_check
    _
  $region7: #{lenet_forward.4} parent=0 // pred_check_branch
    %13 = sbr.rel (0) target = $region9
  $region8: #{lenet_forward.4} parent=0 // pred_region
    _
  $region9: #{lenet_forward.4} parent=0 // pred_fallthru
    _
  // Predicated region
  $region10: #{lenet_forward.4} parent=0 // pred_check
    _
  $region11: #{lenet_forward.4} parent=0 // pred_check_branch
    %15 = sbr.rel (0) target = $region13
  $region12: #{lenet_forward.4} parent=0 // pred_region
    _
  $region13: #{lenet_forward.4} parent=0 // pred_fallthru
    _
  // Predicated region
  $region14: #{lenet_forward.4} parent=0 // pred_check
    _
  $region15: #{lenet_forward.4} parent=0 // pred_check_branch
    %17 = sbr.rel (0) target = $region17
  $region16: #{lenet_forward.4} parent=0 // pred_region
    _
  $region17: #{lenet_forward.4} parent=0 // pred_fallthru
    _
  // Predicated region
  $region18: #{lenet_forward.4} parent=0 // pred_check
    _
  $region19: #{lenet_forward.4} parent=0 // pred_check_branch
    %19 = sbr.rel (0) target = $region21
  $region20: #{lenet_forward.4} parent=0 // pred_region
    _
  $region21: #{lenet_forward.4} parent=0 // pred_fallthru
    _
  %v21 = vld [vmem:[%s0] sm:$0xff]
  %v22 = vld [vmem:[%s0 + $0x8] sm:$0xff]
  %v23 = vld [vmem:[%s0 + $0x10] sm:$0xf]
  %v24 = vld [vmem:[%s0 + $0x14] sm:$0xff]
  %v25 = vld [vmem:[%s0 + $0x1c] sm:$0xff]
  %v26 = vld [vmem:[%s0 + $0x24] sm:$0xf]
  %v27 = vld [vmem:[%s0 + $0x28] sm:$0xff]
  %v28 = vld [vmem:[%s0 + $0x30] sm:$0xff]
  %v29 = vld [vmem:[%s0 + $0x38] sm:$0xf]
  %v30 = vld [vmem:[%s0 + $0x3c] sm:$0xff]
  %v31 = vld [vmem:[%s0 + $0x44] sm:$0xff]
  %v32 = vld [vmem:[%s0 + $0x4c] sm:$0xf]
  %v33 = vld [vmem:[%s0 + $0x50] sm:$0xff]
  %v34 = vld [vmem:[%s0 + $0x58] sm:$0xff]
  %v35 = vld [vmem:[%s0 + $0x60] sm:$0xf]
  %v36 = vld [vmem:[%s0 + $0x64] sm:$0xff]
  %v37 = vld [vmem:[%s0 + $0x6c] sm:$0xff]
  %v38 = vld [vmem:[%s0 + $0x74] sm:$0xf]
  %v39 = vld [vmem:[%s0 + $0x78] sm:$0xff]
  %v40 = vld [vmem:[%s0 + $0x80] sm:$0xff]
  %v41 = vld [vmem:[%s0 + $0x88] sm:$0xf]
  %v42 = vld [vmem:[%s0 + $0x8c] sm:$0xff]
  %v43 = vld [vmem:[%s0 + $0x94] sm:$0xff]
  %v44 = vld [vmem:[%s0 + $0x9c] sm:$0xf]
  %v45 = vld [vmem:[%s4] sm:$0xf]
  %v46 = vld [vmem:[%s4 + $0x4] sm:$0xf]
  %v47 = vld [vmem:[%s4 + $0x8] sm:$0xf]
  %v48 = vld [vmem:[%s4 + $0xc] sm:$0xf]
  %v49 = vld [vmem:[%s4 + $0x10] sm:$0xf]
  %v50 = vld [vmem:[%s4 + $0x14] sm:$0xf]
  %v51 = vld [vmem:[%s4 + $0x18] sm:$0xf]
  %v52 = vld [vmem:[%s4 + $0x1c] sm:$0xf]
  %v53 = vld [vmem:[%s4 + $0x20] sm:$0xf]
  %v54 = vld [vmem:[%s4 + $0x24] sm:$0xf]
  %v55 = vld [vmem:[%s4 + $0x28] sm:$0xf]
  %v56 = vld [vmem:[%s4 + $0x2c] sm:$0xf]
  %v57 = vld [vmem:[%s4 + $0x30] sm:$0xf]
  %v58 = vld [vmem:[%s4 + $0x34] sm:$0xf]
  %v59 = vld [vmem:[%s4 + $0x38] sm:$0xf]
  %v60 = vld [vmem:[%s4 + $0x3c] sm:$0xf]
  %v61 = vld [vmem:[%s4 + $0x40] sm:$0xf]
  %v62 = vld [vmem:[%s4 + $0x44] sm:$0xf]
  %v63 = vld [vmem:[%s4 + $0x48] sm:$0xf]
  %v64 = vld [vmem:[%s4 + $0x4c] sm:$0xf]
  %v65 = vld [vmem:[%s4 + $0x50] sm:$0xf]
  %v66 = vld [vmem:[%s4 + $0x54] sm:$0xf]
  %v67 = vld [vmem:[%s4 + $0x58] sm:$0xf]
  %v68 = vld [vmem:[%s4 + $0x5c] sm:$0xf]
  %v69 = vld [vmem:[%s4 + $0x60] sm:$0xf]
  %v70 = vld [vmem:[%s4 + $0x64] sm:$0xf]
  %v71 = vld [vmem:[%s4 + $0x68] sm:$0xf]
  %v72 = vld [vmem:[%s4 + $0x6c] sm:$0xf]
  %v73 = vld [vmem:[%s4 + $0x70] sm:$0xf]
  %v74 = vld [vmem:[%s4 + $0x74] sm:$0xf]
  %v75 = vld [vmem:[%s4 + $0x78] sm:$0xf]
  %v76 = vld [vmem:[%s4 + $0x7c] sm:$0xf]
  %v77 = vld [vmem:[%s4 + $0x80] sm:$0xf]
  %v78 = vld [vmem:[%s4 + $0x84] sm:$0xf]
  %v79 = vld [vmem:[%s4 + $0x88] sm:$0xf]
  %v80 = vld [vmem:[%s4 + $0x8c] sm:$0xf]
  %v81 = vld [vmem:[%s4 + $0x90] sm:$0xf]
  %v82 = vld [vmem:[%s4 + $0x94] sm:$0xf]
  %v83 = vld [vmem:[%s4 + $0x98] sm:$0xf]
  %v84 = vld [vmem:[%s4 + $0x9c] sm:$0xf]
  %v85 = vld [vmem:[%s4 + $0xa0] sm:$0xf]
  %v86 = vld [vmem:[%s4 + $0xa4] sm:$0xf]
  %v87 = vld [vmem:[%s4 + $0xa8] sm:$0xf]
  %v88 = vld [vmem:[%s4 + $0xac] sm:$0xf]
  %v89 = vld [vmem:[%s4 + $0xb0] sm:$0xf]
  %v90 = vld [vmem:[%s4 + $0xb4] sm:$0xf]
  %v91 = vld [vmem:[%s4 + $0xb8] sm:$0xf]
  %v92 = vld [vmem:[%s4 + $0xbc] sm:$0xf]
  %v93 = vld [vmem:[%s4 + $0xc0] sm:$0xf]
  %v94 = vld [vmem:[%s4 + $0xc4] sm:$0xf]
  %v95 = vld [vmem:[%s4 + $0xc8] sm:$0xf]
  %v96 = vld [vmem:[%s4 + $0xcc] sm:$0xf]
  %v97 = vld [vmem:[%s4 + $0xd0] sm:$0xf]
  %v98 = vld [vmem:[%s4 + $0xd4] sm:$0xf]
  %v99 = vld [vmem:[%s4 + $0xd8] sm:$0xf]
  %v100 = vld [vmem:[%s4 + $0xdc] sm:$0xf]
  %v101 = vld [vmem:[%s4 + $0xe0] sm:$0xf]
  %v102 = vld [vmem:[%s4 + $0xe4] sm:$0xf]
  %v103 = vld [vmem:[%s4 + $0xe8] sm:$0xf]
  %v104 = vld [vmem:[%s4 + $0xec] sm:$0xf]
  %v105 = vld [vmem:[%s4 + $0xf0] sm:$0xf]
  %v106 = vld [vmem:[%s4 + $0xf4] sm:$0xf]
  %v107 = vld [vmem:[%s4 + $0xf8] sm:$0xf]
  %v108 = vld [vmem:[%s4 + $0xfc] sm:$0xf]
  %v109 = vld [vmem:[%s4 + $0x100] sm:$0xf]
  %v110 = vld [vmem:[%s4 + $0x104] sm:$0xf]
  %v111 = vld [vmem:[%s4 + $0x108] sm:$0xf]
  %v112 = vld [vmem:[%s4 + $0x10c] sm:$0xf]
  %v113 = vld [vmem:[%s4 + $0x110] sm:$0xf]
  %v114 = vld [vmem:[%s4 + $0x114] sm:$0xf]
  %v115 = vld [vmem:[%s4 + $0x118] sm:$0xf]
  %v116 = vld [vmem:[%s4 + $0x11c] sm:$0xf]
  %v117 = vld [vmem:[%s4 + $0x120] sm:$0xf]
  %v118 = vld [vmem:[%s4 + $0x124] sm:$0xf]
  %v119 = vld [vmem:[%s4 + $0x128] sm:$0xf]
  %v144 = vunpack.c.l.b16 %v21
  %v145 = vunpack.c.h.b16 %v21
  %v146 = vunpack.c.l.b16 %v22
  %v147 = vunpack.c.h.b16 %v22
  %v148 = vunpack.c.l.b16 %v23
  %v149 = vunpack.c.l.b16 %v24
  %v150 = vunpack.c.h.b16 %v24
  %v151 = vunpack.c.l.b16 %v25
  %v152 = vunpack.c.h.b16 %v25
  %v153 = vunpack.c.l.b16 %v26
  %v154 = vunpack.c.l.b16 %v27
  %v155 = vunpack.c.h.b16 %v27
  %v156 = vunpack.c.l.b16 %v28
  %v157 = vunpack.c.h.b16 %v28
  %v158 = vunpack.c.l.b16 %v29
  %v159 = vunpack.c.l.b16 %v30
  %v160 = vunpack.c.h.b16 %v30
  %v161 = vunpack.c.l.b16 %v31
  %v162 = vunpack.c.h.b16 %v31
  %v163 = vunpack.c.l.b16 %v32
  %v164 = vunpack.c.l.b16 %v33
  %v165 = vunpack.c.h.b16 %v33
  %v166 = vunpack.c.l.b16 %v34
  %v167 = vunpack.c.h.b16 %v34
  %v168 = vunpack.c.l.b16 %v35
  %v169 = vunpack.c.l.b16 %v36
  %v170 = vunpack.c.h.b16 %v36
  %v171 = vunpack.c.l.b16 %v37
  %v172 = vunpack.c.h.b16 %v37
  %v173 = vunpack.c.l.b16 %v38
  %v174 = vunpack.c.l.b16 %v39
  %v175 = vunpack.c.h.b16 %v39
  %v176 = vunpack.c.l.b16 %v40
  %v177 = vunpack.c.h.b16 %v40
  %v178 = vunpack.c.l.b16 %v41
  %v179 = vunpack.c.l.b16 %v42
  %v180 = vunpack.c.h.b16 %v42
  %v181 = vunpack.c.l.b16 %v43
  %v182 = vunpack.c.h.b16 %v43
  %v183 = vunpack.c.l.b16 %v44
  %v184 = vpack.c.b16 %v149, %v144
  %v185 = vpack.c.b16 %v150, %v145
  %v186 = vpack.c.b16 %v151, %v146
  %v187 = vpack.c.b16 %v152, %v147
  %v188 = vpack.c.b16 %v153, %v148
  %v189 = vpack.c.b16 %v159, %v154
  %v190 = vpack.c.b16 %v160, %v155
  %v191 = vpack.c.b16 %v161, %v156
  %v192 = vpack.c.b16 %v162, %v157
  %v193 = vpack.c.b16 %v163, %v158
  %v194 = vpack.c.b16 %v169, %v164
  %v195 = vpack.c.b16 %v170, %v165
  %v196 = vpack.c.b16 %v171, %v166
  %v197 = vpack.c.b16 %v172, %v167
  %v198 = vpack.c.b16 %v173, %v168
  %v199 = vpack.c.b16 %v179, %v174
  %v200 = vpack.c.b16 %v180, %v175
  %v201 = vpack.c.b16 %v181, %v176
  %v202 = vpack.c.b16 %v182, %v177
  %v203 = vpack.c.b16 %v183, %v178
  %v295 = vunpack.c.l.b16 %v45
  %v296 = vunpack.c.l.b16 %v46
  %v297 = vunpack.c.l.b16 %v47
  %v298 = vunpack.c.l.b16 %v48
  %v299 = vunpack.c.l.b16 %v49
  %v300 = vunpack.c.l.b16 %v50
  %v301 = vunpack.c.l.b16 %v51
  %v302 = vunpack.c.l.b16 %v52
  %v303 = vunpack.c.l.b16 %v53
  %v304 = vunpack.c.l.b16 %v54
  %v305 = vunpack.c.l.b16 %v55
  %v306 = vunpack.c.l.b16 %v56
  %v307 = vunpack.c.l.b16 %v57
  %v308 = vunpack.c.l.b16 %v58
  %v309 = vunpack.c.l.b16 %v59
  %v310 = vunpack.c.l.b16 %v60
  %v311 = vunpack.c.l.b16 %v61
  %v312 = vunpack.c.l.b16 %v62
  %v313 = vunpack.c.l.b16 %v63
  %v314 = vunpack.c.l.b16 %v64
  %v315 = vunpack.c.l.b16 %v65
  %v316 = vunpack.c.l.b16 %v66
  %v317 = vunpack.c.l.b16 %v67
  %v318 = vunpack.c.l.b16 %v68
  %v319 = vunpack.c.l.b16 %v69
  %v320 = vunpack.c.l.b16 %v70
  %v321 = vunpack.c.l.b16 %v71
  %v322 = vunpack.c.l.b16 %v72
  %v323 = vunpack.c.l.b16 %v73
  %v324 = vunpack.c.l.b16 %v74
  %v325 = vunpack.c.l.b16 %v75
  %v326 = vunpack.c.l.b16 %v76
  %v327 = vunpack.c.l.b16 %v77
  %v328 = vunpack.c.l.b16 %v78
  %v329 = vunpack.c.l.b16 %v79
  %v330 = vunpack.c.l.b16 %v80
  %v331 = vunpack.c.l.b16 %v81
  %v332 = vunpack.c.l.b16 %v82
  %v333 = vunpack.c.l.b16 %v83
  %v334 = vunpack.c.l.b16 %v84
  %v335 = vunpack.c.l.b16 %v85
  %v336 = vunpack.c.l.b16 %v86
  %v337 = vunpack.c.l.b16 %v87
  %v338 = vunpack.c.l.b16 %v88
  %v339 = vunpack.c.l.b16 %v89
  %v340 = vunpack.c.l.b16 %v90
  %v341 = vunpack.c.l.b16 %v91
  %v342 = vunpack.c.l.b16 %v92
  %v343 = vunpack.c.l.b16 %v93
  %v344 = vunpack.c.l.b16 %v94
  %v345 = vunpack.c.l.b16 %v95
  %v346 = vunpack.c.l.b16 %v96
  %v347 = vunpack.c.l.b16 %v97
  %v348 = vunpack.c.l.b16 %v98
  %v349 = vunpack.c.l.b16 %v99
  %v350 = vunpack.c.l.b16 %v100
  %v351 = vunpack.c.l.b16 %v101
  %v352 = vunpack.c.l.b16 %v102
  %v353 = vunpack.c.l.b16 %v103
  %v354 = vunpack.c.l.b16 %v104
  %v355 = vunpack.c.l.b16 %v105
  %v356 = vunpack.c.l.b16 %v106
  %v357 = vunpack.c.l.b16 %v107
  %v358 = vunpack.c.l.b16 %v108
  %v359 = vunpack.c.l.b16 %v109
  %v360 = vunpack.c.l.b16 %v110
  %v361 = vunpack.c.l.b16 %v111
  %v362 = vunpack.c.l.b16 %v112
  %v363 = vunpack.c.l.b16 %v113
  %v364 = vunpack.c.l.b16 %v114
  %v365 = vunpack.c.l.b16 %v115
  %v366 = vunpack.c.l.b16 %v116
  %v367 = vunpack.c.l.b16 %v117
  %v368 = vunpack.c.l.b16 %v118
  %v369 = vunpack.c.l.b16 %v119
  %v370 = vpack.c.b16 %v296, %v295
  %v371 = vpack.c.b16 %v298, %v297
  %v372 = vpack.c.b16 %v300, %v299
  %v373 = vpack.c.b16 %v302, %v301
  %v374 = vpack.c.b16 %v304, %v303
  %v375 = vpack.c.b16 %v306, %v305
  %v376 = vpack.c.b16 %v308, %v307
  %v377 = vpack.c.b16 %v310, %v309
  %v378 = vpack.c.b16 %v312, %v311
  %v379 = vpack.c.b16 %v314, %v313
  %v380 = vpack.c.b16 %v316, %v315
  %v381 = vpack.c.b16 %v318, %v317
  %v382 = vpack.c.b16 %v320, %v319
  %v383 = vpack.c.b16 %v322, %v321
  %v384 = vpack.c.b16 %v324, %v323
  %v385 = vpack.c.b16 %v326, %v325
  %v386 = vpack.c.b16 %v328, %v327
  %v387 = vpack.c.b16 %v330, %v329
  %v388 = vpack.c.b16 %v332, %v331
  %v389 = vpack.c.b16 %v334, %v333
  %v390 = vpack.c.b16 %v336, %v335
  %v391 = vpack.c.b16 %v338, %v337
  %v392 = vpack.c.b16 %v340, %v339
  %v393 = vpack.c.b16 %v342, %v341
  %v394 = vpack.c.b16 %v344, %v343
  %v395 = vpack.c.b16 %v346, %v345
  %v396 = vpack.c.b16 %v348, %v347
  %v397 = vpack.c.b16 %v350, %v349
  %v398 = vpack.c.b16 %v352, %v351
  %v399 = vpack.c.b16 %v354, %v353
  %v400 = vpack.c.b16 %v356, %v355
  %v401 = vpack.c.b16 %v358, %v357
  %v402 = vpack.c.b16 %v360, %v359
  %v403 = vpack.c.b16 %v362, %v361
  %v404 = vpack.c.b16 %v364, %v363
  %v405 = vpack.c.b16 %v366, %v365
  %v406 = vpack.c.b16 %v368, %v367
  %v407 = vpack.c.b16 %v369, %v369
  %vm445 = vcmask 719872
  %v447 = vsel %vm445, %v188, 0
  %v450 = vsel %vm445, %v193, 0
  %v453 = vsel %vm445, %v198, 0
  %v456 = vsel %vm445, %v203, 0
  %vm458 = vcmask 1043456
  %v460 = vsel %vm458, %v407, 0
  %462 = vmatpush.bf16.msra.mxu0 %v377
  %463 = vmatpush.bf16.msra.mxu0 %v376
  %464 = vmatpush.bf16.msra.mxu0 %v375
  %465 = vmatpush.bf16.msra.mxu0 %v374
  %466 = vmatpush.bf16.msra.mxu0 %v373
  %467 = vmatpush.bf16.msra.mxu0 %v372
  %468 = vmatpush.bf16.msra.mxu0 %v371
  %469 = vmatpush.bf16.msra.mxu0 %v370
  %470 = vmatmul.bf16.gmra.mxu0 %v184
  %v471 = vpop.f32.mrf.mxu0
  %v472 = vadd.f32 0.0, %v471
  %v473 = vpop.f32.mrf.mxu0
  %v474 = vadd.f32 0.0, %v473
  %475 = vmatmul.bf16.gmra.mxu0 %v189
  %v476 = vpop.f32.mrf.mxu0
  %v477 = vadd.f32 0.0, %v476
  %v478 = vpop.f32.mrf.mxu0
  %v479 = vadd.f32 0.0, %v478
  %480 = vmatmul.bf16.gmra.mxu0 %v194
  %v481 = vpop.f32.mrf.mxu0
  %v482 = vadd.f32 0.0, %v481
  %v483 = vpop.f32.mrf.mxu0
  %v484 = vadd.f32 0.0, %v483
  %485 = vmatmul.bf16.gmra.mxu0 %v199
  %v486 = vpop.f32.mrf.mxu0
  %v487 = vadd.f32 0.0, %v486
  %v488 = vpop.f32.mrf.mxu0
  %v489 = vadd.f32 0.0, %v488
  %490 = vdwg.mxu0
  %491 = vmatpush.bf16.msra.mxu0 %v385
  %492 = vmatpush.bf16.msra.mxu0 %v384
  %493 = vmatpush.bf16.msra.mxu0 %v383
  %494 = vmatpush.bf16.msra.mxu0 %v382
  %495 = vmatpush.bf16.msra.mxu0 %v381
  %496 = vmatpush.bf16.msra.mxu0 %v380
  %497 = vmatpush.bf16.msra.mxu0 %v379
  %498 = vmatpush.bf16.msra.mxu0 %v378
  %499 = vmatmul.bf16.gmra.mxu0 %v185
  %v500 = vpop.f32.mrf.mxu0
  %v501 = vadd.f32 %v472, %v500
  %v502 = vpop.f32.mrf.mxu0
  %v503 = vadd.f32 %v474, %v502
  %504 = vmatmul.bf16.gmra.mxu0 %v190
  %v505 = vpop.f32.mrf.mxu0
  %v506 = vadd.f32 %v477, %v505
  %v507 = vpop.f32.mrf.mxu0
  %v508 = vadd.f32 %v479, %v507
  %509 = vmatmul.bf16.gmra.mxu0 %v195
  %v510 = vpop.f32.mrf.mxu0
  %v511 = vadd.f32 %v482, %v510
  %v512 = vpop.f32.mrf.mxu0
  %v513 = vadd.f32 %v484, %v512
  %514 = vmatmul.bf16.gmra.mxu0 %v200
  %v515 = vpop.f32.mrf.mxu0
  %v516 = vadd.f32 %v487, %v515
  %v517 = vpop.f32.mrf.mxu0
  %v518 = vadd.f32 %v489, %v517
  %519 = vdwg.mxu0
  %520 = vmatpush.bf16.msra.mxu0 %v393
  %521 = vmatpush.bf16.msra.mxu0 %v392
  %522 = vmatpush.bf16.msra.mxu0 %v391
  %523 = vmatpush.bf16.msra.mxu0 %v390
  %524 = vmatpush.bf16.msra.mxu0 %v389
  %525 = vmatpush.bf16.msra.mxu0 %v388
  %526 = vmatpush.bf16.msra.mxu0 %v387
  %527 = vmatpush.bf16.msra.mxu0 %v386
  %528 = vmatmul.bf16.gmra.mxu0 %v186
  %v529 = vpop.f32.mrf.mxu0
  %v530 = vadd.f32 %v501, %v529
  %v531 = vpop.f32.mrf.mxu0
  %v532 = vadd.f32 %v503, %v531
  %533 = vmatmul.bf16.gmra.mxu0 %v191
  %v534 = vpop.f32.mrf.mxu0
  %v535 = vadd.f32 %v506, %v534
  %v536 = vpop.f32.mrf.mxu0
  %v537 = vadd.f32 %v508, %v536
  %538 = vmatmul.bf16.gmra.mxu0 %v196
  %v539 = vpop.f32.mrf.mxu0
  %v540 = vadd.f32 %v511, %v539
  %v541 = vpop.f32.mrf.mxu0
  %v542 = vadd.f32 %v513, %v541
  %543 = vmatmul.bf16.gmra.mxu0 %v201
  %v544 = vpop.f32.mrf.mxu0
  %v545 = vadd.f32 %v516, %v544
  %v546 = vpop.f32.mrf.mxu0
  %v547 = vadd.f32 %v518, %v546
  %548 = vdwg.mxu0
  %549 = vmatpush.bf16.msra.mxu0 %v401
  %550 = vmatpush.bf16.msra.mxu0 %v400
  %551 = vmatpush.bf16.msra.mxu0 %v399
  %552 = vmatpush.bf16.msra.mxu0 %v398
  %553 = vmatpush.bf16.msra.mxu0 %v397
  %554 = vmatpush.bf16.msra.mxu0 %v396
  %555 = vmatpush.bf16.msra.mxu0 %v395
  %556 = vmatpush.bf16.msra.mxu0 %v394
  %557 = vmatmul.bf16.gmra.mxu0 %v187
  %v558 = vpop.f32.mrf.mxu0
  %v559 = vadd.f32 %v530, %v558
  %v560 = vpop.f32.mrf.mxu0
  %v561 = vadd.f32 %v532, %v560
  %562 = vmatmul.bf16.gmra.mxu0 %v192
  %v563 = vpop.f32.mrf.mxu0
  %v564 = vadd.f32 %v535, %v563
  %v565 = vpop.f32.mrf.mxu0
  %v566 = vadd.f32 %v537, %v565
  %567 = vmatmul.bf16.gmra.mxu0 %v197
  %v568 = vpop.f32.mrf.mxu0
  %v569 = vadd.f32 %v540, %v568
  %v570 = vpop.f32.mrf.mxu0
  %v571 = vadd.f32 %v542, %v570
  %572 = vmatmul.bf16.gmra.mxu0 %v202
  %v573 = vpop.f32.mrf.mxu0
  %v574 = vadd.f32 %v545, %v573
  %v575 = vpop.f32.mrf.mxu0
  %v576 = vadd.f32 %v547, %v575
  %577 = vdwg.mxu0
  %578 = vmatpush.bf16.msra.mxu0 0
  %579 = vmatpush.bf16.msra.mxu0 0
  %580 = vmatpush.bf16.msra.mxu0 %v460
  %581 = vmatpush.bf16.msra.mxu0 %v406
  %582 = vmatpush.bf16.msra.mxu0 %v405
  %583 = vmatpush.bf16.msra.mxu0 %v404
  %584 = vmatpush.bf16.msra.mxu0 %v403
  %585 = vmatpush.bf16.msra.mxu0 %v402
  %586 = vmatmul.bf16.gmra.mxu0 %v447
  %v587 = vpop.f32.mrf.mxu0
  %v588 = vadd.f32 %v559, %v587
  %v589 = vpop.f32.mrf.mxu0
  %v590 = vadd.f32 %v561, %v589
  %591 = vmatmul.bf16.gmra.mxu0 %v450
  %v592 = vpop.f32.mrf.mxu0
  %v593 = vadd.f32 %v564, %v592
  %v594 = vpop.f32.mrf.mxu0
  %v595 = vadd.f32 %v566, %v594
  %596 = vmatmul.bf16.gmra.mxu0 %v453
  %v597 = vpop.f32.mrf.mxu0
  %v598 = vadd.f32 %v569, %v597
  %v599 = vpop.f32.mrf.mxu0
  %v600 = vadd.f32 %v571, %v599
  %601 = vmatmul.bf16.gmra.mxu0 %v456
  %v602 = vpop.f32.mrf.mxu0
  %v603 = vadd.f32 %v574, %v602
  %v604 = vpop.f32.mrf.mxu0
  %v605 = vadd.f32 %v576, %v604
  %606 = vdwg.mxu0
  %v607 = vmax.f32 %v588, %v593
  %v608 = vmax.f32 %v590, %v595
  %v609 = vmax.f32 %v598, %v603
  %v610 = vmax.f32 %v600, %v605
  %v611 = vmax.f32 %v607, %v609
  %v612 = vmax.f32 %v608, %v610
  %v613 = vld [vmem:[%s1] sm:$0xff]
  %v614 = vld [vmem:[%s1 + $0x8] sm:$0xff]
  %616 = vset.pattern.permute.xlu0 0
  %617 = vperm.xlu0 %616, %v613
  %v618 = vpop.permute.xlu0 %617
  %621 = vset.pattern.permute.xlu0 0
  %622 = vperm.xlu0 %621, %v614
  %v623 = vpop.permute.xlu0 %622
  %v625 = vadd.f32 %v611, %v618
  %v626 = vadd.f32 %v612, %v623
  %v627 = vmax.f32 %v625, 0.0
  %v628 = vmax.f32 %v626, 0.0
  %v629 = vld [vmem:[%s2] sm:$0xff]
  %v630 = vld [vmem:[%s2 + $0x8] sm:$0xff]
  %632 = vset.pattern.permute.xlu0 0
  %633 = vperm.xlu0 %632, %v629
  %v634 = vpop.permute.xlu0 %633
  %637 = vset.pattern.permute.xlu0 0
  %638 = vperm.xlu0 %637, %v630
  %v639 = vpop.permute.xlu0 %638
  %v641 = vmul.f32 %v627, %v634
  %v642 = vmul.f32 %v628, %v639
  %v643 = vld [vmem:[%s3] sm:$0xff]
  %v644 = vld [vmem:[%s3 + $0x8] sm:$0xff]
  %646 = vset.pattern.permute.xlu0 0
  %647 = vperm.xlu0 %646, %v643
  %v648 = vpop.permute.xlu0 %647
  %651 = vset.pattern.permute.xlu0 0
  %652 = vperm.xlu0 %651, %v644
  %v653 = vpop.permute.xlu0 %652
  %v655 = vadd.f32 %v641, %v648
  %v656 = vadd.f32 %v642, %v653
  %657 = vst [vmem:[%s5] sm:$0xff] %v655
  %658 = vst [vmem:[%s5 + $0x8] sm:$0xff] %v656
  // Predicated region
  $region22: #{lenet_forward.4} parent=0 // pred_check
    _
  $region23: #{lenet_forward.4} parent=0 // pred_check_branch
    %660 = sbr.rel (0) target = $region25
  $region24: #{lenet_forward.4} parent=0 // pred_region
    _
  $region25: #{lenet_forward.4} parent=0 // pred_fallthru
    _
  // Predicated region
  $region26: #{lenet_forward.4} parent=0 // pred_check
    _
  $region27: #{lenet_forward.4} parent=0 // pred_check_branch
    %662 = sbr.rel (0) target = $region29
  $region28: #{lenet_forward.4} parent=0 // pred_region
    _
  $region29: #{lenet_forward.4} parent=0 // pred_fallthru
    _

</llo_original>
